<compile_context>
chip_gen: v5e
topology: v5e:2x2
jax: 0.10.0
libtpu: 0.0.40
codegen_flags: <defaults>
</compile_context>

<pallas_src>
import functools

import jax
import jax.numpy as jnp
from jax.experimental import pallas as pl
from jax.experimental.pallas import tpu as pltpu

LN_EPS = 1e-5


def _layer_norm(x, gamma, beta, eps=LN_EPS):
    mu = jnp.mean(x, axis=-1, keepdims=True)
    var = jnp.mean(jnp.square(x - mu), axis=-1, keepdims=True)
    return (x - mu) * jax.lax.rsqrt(var + eps) * gamma + beta


# --------------------------- fused forward kernel --------------------------- #
def _fused_forward_kernel(emb_ref, amask_ref, gmask_ref, emb_ln_ref,
                          wqkv_ref, bqkv_ref, wo_ref, w1_ref, b1_ref,
                          w2_ref, vech_ref,
                          head_ln_ref, clf_w_ref, clf_b_ref,
                          o_ref, h_scr, *, num_heads):
    l = pl.program_id(0)
    num_layers = pl.num_programs(0)

    B, S, H = h_scr.shape
    hd = H // num_heads

    # -------- prologue: embedding LayerNorm (first grid step only) -------- #
    @pl.when(l == 0)
    def _():
        e = emb_ref[...].reshape(B * S, H)
        h_scr[...] = _layer_norm(e, emb_ln_ref[0:1],
                                 emb_ln_ref[1:2]).reshape(B, S, H)

    x2 = h_scr[...].reshape(B * S, H)

    # -------- self-attention: fused QKV projection (scale folded in wq) ---- #
    qkv = (jnp.dot(x2, wqkv_ref[0], preferred_element_type=jnp.float32)
           + bqkv_ref[0])                                 # (B*S, 3H)
    q = qkv[:, :H].reshape(B, S, H)
    k = qkv[:, H:2 * H].reshape(B, S, H)
    v = qkv[:, 2 * H:].reshape(B, S, H)

    neg = (1.0 - amask_ref[...])[:, None, :] * -1e9       # (B, 1, S)

    # TODO(synk): a whole-head 'bqhd,bkhd->bhqk' einsum needs a multi-batch-dim
    # dot_general / mid-axis transpose that Mosaic does not reliably lower at
    # these tiny shapes, so heads remain a short static unroll (NH=4).
    ctx_heads = []
    for h in range(num_heads):
        qh = q[:, :, h * hd:(h + 1) * hd]                 # (B, S, hd)
        kh = k[:, :, h * hd:(h + 1) * hd]
        vh = v[:, :, h * hd:(h + 1) * hd]
        s = jnp.einsum('bqd,bkd->bqk', qh, kh,
                       preferred_element_type=jnp.float32) + neg
        s = s - jnp.max(s, axis=-1, keepdims=True)
        p = jnp.exp(s)
        p = p * pl.reciprocal(jnp.sum(p, axis=-1, keepdims=True), approx=True)
        ctx_heads.append(jnp.einsum('bqk,bkd->bqd', p, vh,
                                    preferred_element_type=jnp.float32))
    ctx2 = jnp.concatenate(ctx_heads, axis=-1).reshape(B * S, H)

    vecs = vech_ref[0]       # (6, H): [bo, ln1_g, ln1_b, b2, ln2_g, ln2_b]
    attn_out = (jnp.dot(ctx2, wo_ref[0], preferred_element_type=jnp.float32)
                + vecs[0:1])
    h1 = _layer_norm(x2 + attn_out, vecs[1:2], vecs[2:3])

    # ------------------------------ FFN ----------------------------------- #
    ff = jnp.dot(h1, w1_ref[0], preferred_element_type=jnp.float32) + b1_ref[0]
    ff = jax.nn.gelu(ff, approximate=True)
    ff = jnp.dot(ff, w2_ref[0], preferred_element_type=jnp.float32) + vecs[3:4]

    out2 = _layer_norm(h1 + ff, vecs[4:5], vecs[5:6])
    h_scr[...] = out2.reshape(B, S, H)

    # -------- epilogue: cross-encoder pooling head (last grid step) -------- #
    @pl.when(l == num_layers - 1)
    def _():
        hfin = out2.reshape(B, S, H)
        gmask = gmask_ref[...]                            # (B, S)
        cls_rep = hfin[:, 0, :]                           # (B, H)
        summed = jnp.sum(hfin * gmask[:, :, None], axis=1)        # (B, H)
        count = jnp.maximum(jnp.sum(gmask, axis=1, keepdims=True), 1.0)
        mean_g = summed * pl.reciprocal(count, approx=True)
        combined = jnp.concatenate([cls_rep, mean_g], axis=-1)    # (B, 2H)
        # dropout(p=0.2): identity in eval mode
        combined = _layer_norm(combined, head_ln_ref[0:1], head_ln_ref[1:2])
        logits = (jnp.dot(combined, clf_w_ref[...],
                          preferred_element_type=jnp.float32) + clf_b_ref[...])
        o_ref[...] = logits                               # (B, 1)


# ------------------------------ parameters ---------------------------------- #
def init_params(key, vocab, max_pos, hidden, ff, num_layers, num_heads):
    std = 0.02
    hd = hidden // num_heads
    scale = 1.0 / (hd ** 0.5)
    keys = jax.random.split(key, 4 + num_layers)

    def nrm(k, shape, s=std):
        return jax.random.normal(k, shape, jnp.float32) * s

    wqkv, bqkv, wo, w1, b1, w2, vech = [], [], [], [], [], [], []
    for li in range(num_layers):
        lk = jax.random.split(keys[4 + li], 6)
        wq = nrm(lk[0], (hidden, hidden)) * scale   # fold 1/sqrt(hd) into wq
        wk = nrm(lk[1], (hidden, hidden))
        wv = nrm(lk[2], (hidden, hidden))
        wqkv.append(jnp.concatenate([wq, wk, wv], axis=1))        # (H, 3H)
        bqkv.append(jnp.zeros((1, 3 * hidden), jnp.float32))
        wo.append(nrm(lk[3], (hidden, hidden)))
        w1.append(nrm(lk[4], (hidden, ff)))
        b1.append(jnp.zeros((1, ff), jnp.float32))
        w2.append(nrm(lk[5], (ff, hidden)))
        # packed per-layer H-wide vectors: [bo, ln1_g, ln1_b, b2, ln2_g, ln2_b]
        vech.append(jnp.stack([jnp.zeros(hidden), jnp.ones(hidden),
                               jnp.zeros(hidden), jnp.zeros(hidden),
                               jnp.ones(hidden), jnp.zeros(hidden)],
                              axis=0).astype(jnp.float32))

    return {
        'word_emb': nrm(keys[0], (vocab, hidden)),
        'pos_emb': nrm(keys[1], (max_pos, hidden)),
        'type_emb': nrm(keys[2], (1, hidden)),
        'emb_ln': jnp.stack([jnp.ones(hidden),
                             jnp.zeros(hidden)]).astype(jnp.float32),
        'head_ln': jnp.stack([jnp.ones(2 * hidden),
                              jnp.zeros(2 * hidden)]).astype(jnp.float32),
        # classifier: nn.Linear(2H, 1), kaiming_normal (fan_in = 2H)
        'clf_w': nrm(keys[3], (2 * hidden, 1), s=(2.0 / (2 * hidden)) ** 0.5),
        'clf_b': jnp.zeros((1, 1), jnp.float32),
        'wqkv': jnp.stack(wqkv),    # (L, H, 3H)
        'bqkv': jnp.stack(bqkv),    # (L, 1, 3H)
        'wo': jnp.stack(wo),        # (L, H, H)
        'w1': jnp.stack(w1),        # (L, H, FF)
        'b1': jnp.stack(b1),        # (L, 1, FF)
        'w2': jnp.stack(w2),        # (L, FF, H)
        'vech': jnp.stack(vech),    # (L, 6, H)
    }


# ------------------------------ full forward --------------------------------- #
def longformer_cross_encoder_forward(params, input_ids, attention_mask,
                                     global_attention_mask, num_heads):
    B, S = input_ids.shape
    H = params['word_emb'].shape[1]
    L = params['wqkv'].shape[0]
    amask = attention_mask.astype(jnp.float32)
    gmask = global_attention_mask.astype(jnp.float32)

    # Embedding gather + adds are glue in plain JAX; everything downstream
    # (embedding LN + L encoder layers + head) runs in ONE fused pallas_call.
    emb = (params['word_emb'][input_ids]
           + params['pos_emb'][jnp.arange(S) + 2][None, :, :]
           + params['type_emb'][0][None, None, :]).astype(jnp.float32)

    def const_spec(a):           # same block at every layer step
        nd = a.ndim
        return pl.BlockSpec(a.shape, lambda l, _nd=nd: (0,) * _nd)

    def layer_spec(a):           # leading dim blocked over the layer grid axis
        nd = a.ndim
        return pl.BlockSpec((1,) + a.shape[1:],
                            lambda l, _nd=nd: (l,) + (0,) * (_nd - 1))

    args = (emb, amask, gmask, params['emb_ln'],
            params['wqkv'], params['bqkv'], params['wo'],
            params['w1'], params['b1'], params['w2'], params['vech'],
            params['head_ln'], params['clf_w'], params['clf_b'])
    in_specs = [const_spec(emb), const_spec(amask), const_spec(gmask),
                const_spec(params['emb_ln']),
                layer_spec(params['wqkv']), layer_spec(params['bqkv']),
                layer_spec(params['wo']),
                layer_spec(params['w1']), layer_spec(params['b1']),
                layer_spec(params['w2']), layer_spec(params['vech']),
                const_spec(params['head_ln']), const_spec(params['clf_w']),
                const_spec(params['clf_b'])]

    kernel = functools.partial(_fused_forward_kernel, num_heads=num_heads)
    return pl.pallas_call(
        kernel,
        out_shape=jax.ShapeDtypeStruct((B, 1), jnp.float32),
        grid=(L,),
        in_specs=in_specs,
        out_specs=pl.BlockSpec((B, 1), lambda l: (0, 0)),
        scratch_shapes=[pltpu.VMEM((B, S, H), jnp.float32)],
        compiler_params=pltpu.CompilerParams(
            dimension_semantics=("arbitrary",)),   # layer axis carries the
                                                   # resident activation
    )(*args)


# ---------------------------------- main ------------------------------------- #
if __name__ == "__main__":
    B, S, H, NH, L = 2, 8, 32, 4, 2
    FF = 4 * H
    VOCAB, MAX_POS = 64, 128

    key = jax.random.PRNGKey(0)
    k_params, k_ids = jax.random.split(key)

    params = init_params(k_params, VOCAB, MAX_POS, H, FF, L, NH)

    input_ids = jax.random.randint(k_ids, (B, S), 0, VOCAB, dtype=jnp.int32)
    attention_mask = jnp.ones((B, S), jnp.float32).at[1, -2:].set(0.0)
    global_attention_mask = jnp.zeros((B, S), jnp.float32).at[:, 0].set(1.0)
    global_attention_mask = global_attention_mask.at[:, 1].set(1.0)

    logits = longformer_cross_encoder_forward(
        params, input_ids, attention_mask, global_attention_mask, NH)
    logits = jax.block_until_ready(logits)
    assert logits.shape == (B, 1) and logits.dtype == jnp.float32
    print("KERNEL_OK")
</pallas_src>

<mosaic_0001>
module attributes {stable_mosaic.version = 11 : i64} {
  func.func @_fused_forward_kernel(%arg0: i32, %arg1: memref<2x8x32xf32, #tpu.memory_space<vmem>>, %arg2: memref<2x8xf32, #tpu.memory_space<vmem>>, %arg3: memref<2x8xf32, #tpu.memory_space<vmem>>, %arg4: memref<2x32xf32, #tpu.memory_space<vmem>>, %arg5: memref<1x32x96xf32, #tpu.memory_space<vmem>>, %arg6: memref<1x1x96xf32, #tpu.memory_space<vmem>>, %arg7: memref<1x32x32xf32, #tpu.memory_space<vmem>>, %arg8: memref<1x32x128xf32, #tpu.memory_space<vmem>>, %arg9: memref<1x1x128xf32, #tpu.memory_space<vmem>>, %arg10: memref<1x128x32xf32, #tpu.memory_space<vmem>>, %arg11: memref<1x6x32xf32, #tpu.memory_space<vmem>>, %arg12: memref<2x64xf32, #tpu.memory_space<vmem>>, %arg13: memref<64x1xf32, #tpu.memory_space<vmem>>, %arg14: memref<1x1xf32, #tpu.memory_space<vmem>>, %arg15: memref<2x1xf32, #tpu.memory_space<vmem>>, %arg16: memref<2x8x32xf32, #tpu.memory_space<vmem>>) attributes {dimension_semantics = [#tpu.dimension_semantics<arbitrary>], iteration_bounds = array<i64: 2>, scalar_prefetch = 0 : i64, scratch_operands = 1 : i64, tpu.core_type = #tpu.core_type<tc>, window_params = [{pipeline_mode = #tpu.pipeline_mode<synchronous>, transform_indices = @transform_0, window_bounds = array<i64: 2, 8, 32>}, {pipeline_mode = #tpu.pipeline_mode<synchronous>, transform_indices = @transform_1, window_bounds = array<i64: 2, 8>}, {pipeline_mode = #tpu.pipeline_mode<synchronous>, transform_indices = @transform_2, window_bounds = array<i64: 2, 8>}, {pipeline_mode = #tpu.pipeline_mode<synchronous>, transform_indices = @transform_3, window_bounds = array<i64: 2, 32>}, {transform_indices = @transform_4, window_bounds = array<i64: 1, 32, 96>}, {transform_indices = @transform_5, window_bounds = array<i64: 1, 1, 96>}, {transform_indices = @transform_6, window_bounds = array<i64: 1, 32, 32>}, {transform_indices = @transform_7, window_bounds = array<i64: 1, 32, 128>}, {transform_indices = @transform_8, window_bounds = array<i64: 1, 1, 128>}, {transform_indices = @transform_9, window_bounds = array<i64: 1, 128, 32>}, {transform_indices = @transform_10, window_bounds = array<i64: 1, 6, 32>}, {pipeline_mode = #tpu.pipeline_mode<synchronous>, transform_indices = @transform_11, window_bounds = array<i64: 2, 64>}, {pipeline_mode = #tpu.pipeline_mode<synchronous>, transform_indices = @transform_12, window_bounds = array<i64: 64, 1>}, {pipeline_mode = #tpu.pipeline_mode<synchronous>, transform_indices = @transform_13, window_bounds = array<i64: 1, 1>}, {pipeline_mode = #tpu.pipeline_mode<synchronous>, transform_indices = @transform_14, window_bounds = array<i64: 2, 1>}]} {
    %c0_i32 = arith.constant 0 : i32
    %0 = arith.cmpi eq, %arg0, %c0_i32 : i32
    %1 = arith.extui %0 : i1 to i32
    %c0_i32_0 = arith.constant 0 : i32
    %2 = arith.cmpi ne, %1, %c0_i32_0 : i32
    scf.if %2 {
      %c0_65 = arith.constant 0 : index
      %c0_66 = arith.constant 0 : index
      %c0_67 = arith.constant 0 : index
      %183 = vector.load %arg1[%c0_65, %c0_66, %c0_67] : memref<2x8x32xf32, #tpu.memory_space<vmem>>, vector<2x8x32xf32>
      %184 = vector.shape_cast %183 : vector<2x8x32xf32> to vector<16x32xf32>
      %c0_68 = arith.constant 0 : index
      %c0_69 = arith.constant 0 : index
      %185 = vector.load %arg4[%c0_68, %c0_69] : memref<2x32xf32, #tpu.memory_space<vmem>>, vector<1x32xf32>
      %c1 = arith.constant 1 : index
      %c0_70 = arith.constant 0 : index
      %186 = vector.load %arg4[%c1, %c0_70] : memref<2x32xf32, #tpu.memory_space<vmem>>, vector<1x32xf32>
      %cst_71 = arith.constant dense<0.000000e+00> : vector<16xf32>
      %187 = vector.multi_reduction <add>, %184, %cst_71 [1] : vector<16x32xf32> to vector<16xf32>
      %188 = vector.shape_cast %187 : vector<16xf32> to vector<16x1xf32>
      %cst_72 = arith.constant 3.200000e+01 : f32
      %189 = vector.broadcast %cst_72 : f32 to vector<16x1xf32>
      %190 = arith.divf %188, %189 : vector<16x1xf32>
      %191 = vector.broadcast %190 : vector<16x1xf32> to vector<16x32xf32>
      %192 = arith.subf %184, %191 : vector<16x32xf32>
      %193 = arith.mulf %192, %192 : vector<16x32xf32>
      %cst_73 = arith.constant dense<0.000000e+00> : vector<16xf32>
      %194 = vector.multi_reduction <add>, %193, %cst_73 [1] : vector<16x32xf32> to vector<16xf32>
      %195 = vector.shape_cast %194 : vector<16xf32> to vector<16x1xf32>
      %cst_74 = arith.constant 3.200000e+01 : f32
      %196 = vector.broadcast %cst_74 : f32 to vector<16x1xf32>
      %197 = arith.divf %195, %196 : vector<16x1xf32>
      %198 = vector.broadcast %190 : vector<16x1xf32> to vector<16x32xf32>
      %199 = arith.subf %184, %198 : vector<16x32xf32>
      %cst_75 = arith.constant 9.99999974E-6 : f32
      %200 = vector.broadcast %cst_75 : f32 to vector<16x1xf32>
      %201 = arith.addf %197, %200 : vector<16x1xf32>
      %202 = math.rsqrt %201 : vector<16x1xf32>
      %203 = vector.broadcast %202 : vector<16x1xf32> to vector<16x32xf32>
      %204 = arith.mulf %199, %203 : vector<16x32xf32>
      %205 = vector.broadcast %185 : vector<1x32xf32> to vector<16x32xf32>
      %206 = arith.mulf %204, %205 : vector<16x32xf32>
      %207 = vector.broadcast %186 : vector<1x32xf32> to vector<16x32xf32>
      %208 = arith.addf %206, %207 : vector<16x32xf32>
      %209 = vector.shape_cast %208 : vector<16x32xf32> to vector<2x8x32xf32>
      %c0_76 = arith.constant 0 : index
      %c0_77 = arith.constant 0 : index
      %c0_78 = arith.constant 0 : index
      %210 = vector.load %arg16[%c0_76, %c0_77, %c0_78] : memref<2x8x32xf32, #tpu.memory_space<vmem>>, vector<2x8x32xf32>
      tpu.vector_store %arg16[%c0_76, %c0_77, %c0_78], %209 {strides = array<i32>} : memref<2x8x32xf32, #tpu.memory_space<vmem>>, vector<2x8x32xf32>,
    } else {
    }
    %c0 = arith.constant 0 : index
    %c0_1 = arith.constant 0 : index
    %c0_2 = arith.constant 0 : index
    %3 = vector.load %arg16[%c0, %c0_1, %c0_2] : memref<2x8x32xf32, #tpu.memory_space<vmem>>, vector<2x8x32xf32>
    %4 = vector.shape_cast %3 : vector<2x8x32xf32> to vector<16x32xf32>
    %c0_3 = arith.constant 0 : index
    %c0_4 = arith.constant 0 : index
    %c0_5 = arith.constant 0 : index
    %5 = vector.load %arg5[%c0_3, %c0_4, %c0_5] : memref<1x32x96xf32, #tpu.memory_space<vmem>>, vector<1x32x96xf32>
    %6 = vector.shape_cast %5 : vector<1x32x96xf32> to vector<32x96xf32>
    %cst = arith.constant dense<0.000000e+00> : vector<16x96xf32>
    %7 = tpu.matmul %4, %6, %cst {dimension_numbers = #tpu.dot_dimension_numbers<[1], [0], [0], [1], [0, 0, 1, 1], [], []>} : vector<16x32xf32>, vector<32x96xf32>, vector<16x96xf32> -> vector<16x96xf32>
    %c0_6 = arith.constant 0 : index
    %c0_7 = arith.constant 0 : index
    %c0_8 = arith.constant 0 : index
    %8 = vector.load %arg6[%c0_6, %c0_7, %c0_8] : memref<1x1x96xf32, #tpu.memory_space<vmem>>, vector<1x1x96xf32>
    %9 = vector.shape_cast %8 : vector<1x1x96xf32> to vector<1x96xf32>
    %10 = vector.broadcast %9 : vector<1x96xf32> to vector<16x96xf32>
    %11 = arith.addf %7, %10 : vector<16x96xf32>
    %12 = vector.extract_strided_slice %11 {offsets = [0, 0], sizes = [16, 32], strides = [1, 1]} : vector<16x96xf32> to vector<16x32xf32>
    %13 = vector.shape_cast %12 : vector<16x32xf32> to vector<2x8x32xf32>
    %14 = vector.extract_strided_slice %11 {offsets = [0, 32], sizes = [16, 32], strides = [1, 1]} : vector<16x96xf32> to vector<16x32xf32>
    %15 = vector.shape_cast %14 : vector<16x32xf32> to vector<2x8x32xf32>
    %16 = vector.extract_strided_slice %11 {offsets = [0, 64], sizes = [16, 32], strides = [1, 1]} : vector<16x96xf32> to vector<16x32xf32>
    %17 = vector.shape_cast %16 : vector<16x32xf32> to vector<2x8x32xf32>
    %c0_9 = arith.constant 0 : index
    %c0_10 = arith.constant 0 : index
    %18 = vector.load %arg2[%c0_9, %c0_10] : memref<2x8xf32, #tpu.memory_space<vmem>>, vector<2x8xf32>
    %cst_11 = arith.constant 1.000000e+00 : f32
    %19 = vector.broadcast %cst_11 : f32 to vector<2x8xf32>
    %20 = arith.subf %19, %18 : vector<2x8xf32>
    %21 = vector.shape_cast %20 : vector<2x8xf32> to vector<2x1x8xf32>
    %cst_12 = arith.constant -1.000000e+09 : f32
    %22 = vector.broadcast %cst_12 : f32 to vector<2x1x8xf32>
    %23 = arith.mulf %21, %22 : vector<2x1x8xf32>
    %24 = vector.extract_strided_slice %13 {offsets = [0, 0, 0], sizes = [2, 8, 8], strides = [1, 1, 1]} : vector<2x8x32xf32> to vector<2x8x8xf32>
    %25 = vector.extract_strided_slice %15 {offsets = [0, 0, 0], sizes = [2, 8, 8], strides = [1, 1, 1]} : vector<2x8x32xf32> to vector<2x8x8xf32>
    %26 = vector.extract_strided_slice %17 {offsets = [0, 0, 0], sizes = [2, 8, 8], strides = [1, 1, 1]} : vector<2x8x32xf32> to vector<2x8x8xf32>
    "tpu.trace_start"() <{level = 10 : i32, message = "bqd,bkd->bqk"}> : () -> ()
    %cst_13 = arith.constant dense<0.000000e+00> : vector<2x8x8xf32>
    %27 = tpu.matmul %24, %25, %cst_13 {dimension_numbers = #tpu.dot_dimension_numbers<[2], [2], [1], [1], [0, 0, 0, 1, 1, 1], [0], [0]>} : vector<2x8x8xf32>, vector<2x8x8xf32>, vector<2x8x8xf32> -> vector<2x8x8xf32>
    "tpu.trace_stop"() : () -> ()
    %28 = vector.broadcast %23 : vector<2x1x8xf32> to vector<2x8x8xf32>
    %29 = arith.addf %27, %28 : vector<2x8x8xf32>
    %cst_14 = arith.constant dense<0xFF800000> : vector<2x8xf32>
    %30 = vector.multi_reduction <maximumf>, %29, %cst_14 [2] : vector<2x8x8xf32> to vector<2x8xf32>
    %31 = vector.shape_cast %30 : vector<2x8xf32> to vector<2x8x1xf32>
    %32 = vector.broadcast %31 : vector<2x8x1xf32> to vector<2x8x8xf32>
    %33 = arith.subf %29, %32 : vector<2x8x8xf32>
    %34 = math.exp %33 : vector<2x8x8xf32>
    %cst_15 = arith.constant dense<0.000000e+00> : vector<2x8xf32>
    %35 = vector.multi_reduction <add>, %34, %cst_15 [2] : vector<2x8x8xf32> to vector<2x8xf32>
    %36 = vector.shape_cast %35 : vector<2x8xf32> to vector<2x8x1xf32>
    %37 = tpu.reciprocal %36 {approx = true} : vector<2x8x1xf32> -> vector<2x8x1xf32>
    %38 = vector.broadcast %37 : vector<2x8x1xf32> to vector<2x8x8xf32>
    %39 = arith.mulf %34, %38 : vector<2x8x8xf32>
    "tpu.trace_start"() <{level = 10 : i32, message = "bqk,bkd->bqd"}> : () -> ()
    %cst_16 = arith.constant dense<0.000000e+00> : vector<2x8x8xf32>
    %40 = tpu.matmul %39, %26, %cst_16 {dimension_numbers = #tpu.dot_dimension_numbers<[2], [1], [1], [2], [0, 0, 0, 1, 1, 2], [0], [0]>} : vector<2x8x8xf32>, vector<2x8x8xf32>, vector<2x8x8xf32> -> vector<2x8x8xf32>
    "tpu.trace_stop"() : () -> ()
    %41 = vector.extract_strided_slice %13 {offsets = [0, 0, 8], sizes = [2, 8, 8], strides = [1, 1, 1]} : vector<2x8x32xf32> to vector<2x8x8xf32>
    %42 = vector.extract_strided_slice %15 {offsets = [0, 0, 8], sizes = [2, 8, 8], strides = [1, 1, 1]} : vector<2x8x32xf32> to vector<2x8x8xf32>
    %43 = vector.extract_strided_slice %17 {offsets = [0, 0, 8], sizes = [2, 8, 8], strides = [1, 1, 1]} : vector<2x8x32xf32> to vector<2x8x8xf32>
    "tpu.trace_start"() <{level = 10 : i32, message = "bqd,bkd->bqk"}> : () -> ()
    %cst_17 = arith.constant dense<0.000000e+00> : vector<2x8x8xf32>
    %44 = tpu.matmul %41, %42, %cst_17 {dimension_numbers = #tpu.dot_dimension_numbers<[2], [2], [1], [1], [0, 0, 0, 1, 1, 1], [0], [0]>} : vector<2x8x8xf32>, vector<2x8x8xf32>, vector<2x8x8xf32> -> vector<2x8x8xf32>
    "tpu.trace_stop"() : () -> ()
    %45 = vector.broadcast %23 : vector<2x1x8xf32> to vector<2x8x8xf32>
    %46 = arith.addf %44, %45 : vector<2x8x8xf32>
    %cst_18 = arith.constant dense<0xFF800000> : vector<2x8xf32>
    %47 = vector.multi_reduction <maximumf>, %46, %cst_18 [2] : vector<2x8x8xf32> to vector<2x8xf32>
    %48 = vector.shape_cast %47 : vector<2x8xf32> to vector<2x8x1xf32>
    %49 = vector.broadcast %48 : vector<2x8x1xf32> to vector<2x8x8xf32>
    %50 = arith.subf %46, %49 : vector<2x8x8xf32>
    %51 = math.exp %50 : vector<2x8x8xf32>
    %cst_19 = arith.constant dense<0.000000e+00> : vector<2x8xf32>
    %52 = vector.multi_reduction <add>, %51, %cst_19 [2] : vector<2x8x8xf32> to vector<2x8xf32>
    %53 = vector.shape_cast %52 : vector<2x8xf32> to vector<2x8x1xf32>
    %54 = tpu.reciprocal %53 {approx = true} : vector<2x8x1xf32> -> vector<2x8x1xf32>
    %55 = vector.broadcast %54 : vector<2x8x1xf32> to vector<2x8x8xf32>
    %56 = arith.mulf %51, %55 : vector<2x8x8xf32>
    "tpu.trace_start"() <{level = 10 : i32, message = "bqk,bkd->bqd"}> : () -> ()
    %cst_20 = arith.constant dense<0.000000e+00> : vector<2x8x8xf32>
    %57 = tpu.matmul %56, %43, %cst_20 {dimension_numbers = #tpu.dot_dimension_numbers<[2], [1], [1], [2], [0, 0, 0, 1, 1, 2], [0], [0]>} : vector<2x8x8xf32>, vector<2x8x8xf32>, vector<2x8x8xf32> -> vector<2x8x8xf32>
    "tpu.trace_stop"() : () -> ()
    %58 = vector.extract_strided_slice %13 {offsets = [0, 0, 16], sizes = [2, 8, 8], strides = [1, 1, 1]} : vector<2x8x32xf32> to vector<2x8x8xf32>
    %59 = vector.extract_strided_slice %15 {offsets = [0, 0, 16], sizes = [2, 8, 8], strides = [1, 1, 1]} : vector<2x8x32xf32> to vector<2x8x8xf32>
    %60 = vector.extract_strided_slice %17 {offsets = [0, 0, 16], sizes = [2, 8, 8], strides = [1, 1, 1]} : vector<2x8x32xf32> to vector<2x8x8xf32>
    "tpu.trace_start"() <{level = 10 : i32, message = "bqd,bkd->bqk"}> : () -> ()
    %cst_21 = arith.constant dense<0.000000e+00> : vector<2x8x8xf32>
    %61 = tpu.matmul %58, %59, %cst_21 {dimension_numbers = #tpu.dot_dimension_numbers<[2], [2], [1], [1], [0, 0, 0, 1, 1, 1], [0], [0]>} : vector<2x8x8xf32>, vector<2x8x8xf32>, vector<2x8x8xf32> -> vector<2x8x8xf32>
    "tpu.trace_stop"() : () -> ()
    %62 = vector.broadcast %23 : vector<2x1x8xf32> to vector<2x8x8xf32>
    %63 = arith.addf %61, %62 : vector<2x8x8xf32>
    %cst_22 = arith.constant dense<0xFF800000> : vector<2x8xf32>
    %64 = vector.multi_reduction <maximumf>, %63, %cst_22 [2] : vector<2x8x8xf32> to vector<2x8xf32>
    %65 = vector.shape_cast %64 : vector<2x8xf32> to vector<2x8x1xf32>
    %66 = vector.broadcast %65 : vector<2x8x1xf32> to vector<2x8x8xf32>
    %67 = arith.subf %63, %66 : vector<2x8x8xf32>
    %68 = math.exp %67 : vector<2x8x8xf32>
    %cst_23 = arith.constant dense<0.000000e+00> : vector<2x8xf32>
    %69 = vector.multi_reduction <add>, %68, %cst_23 [2] : vector<2x8x8xf32> to vector<2x8xf32>
    %70 = vector.shape_cast %69 : vector<2x8xf32> to vector<2x8x1xf32>
    %71 = tpu.reciprocal %70 {approx = true} : vector<2x8x1xf32> -> vector<2x8x1xf32>
    %72 = vector.broadcast %71 : vector<2x8x1xf32> to vector<2x8x8xf32>
    %73 = arith.mulf %68, %72 : vector<2x8x8xf32>
    "tpu.trace_start"() <{level = 10 : i32, message = "bqk,bkd->bqd"}> : () -> ()
    %cst_24 = arith.constant dense<0.000000e+00> : vector<2x8x8xf32>
    %74 = tpu.matmul %73, %60, %cst_24 {dimension_numbers = #tpu.dot_dimension_numbers<[2], [1], [1], [2], [0, 0, 0, 1, 1, 2], [0], [0]>} : vector<2x8x8xf32>, vector<2x8x8xf32>, vector<2x8x8xf32> -> vector<2x8x8xf32>
    "tpu.trace_stop"() : () -> ()
    %75 = vector.extract_strided_slice %13 {offsets = [0, 0, 24], sizes = [2, 8, 8], strides = [1, 1, 1]} : vector<2x8x32xf32> to vector<2x8x8xf32>
    %76 = vector.extract_strided_slice %15 {offsets = [0, 0, 24], sizes = [2, 8, 8], strides = [1, 1, 1]} : vector<2x8x32xf32> to vector<2x8x8xf32>
    %77 = vector.extract_strided_slice %17 {offsets = [0, 0, 24], sizes = [2, 8, 8], strides = [1, 1, 1]} : vector<2x8x32xf32> to vector<2x8x8xf32>
    "tpu.trace_start"() <{level = 10 : i32, message = "bqd,bkd->bqk"}> : () -> ()
    %cst_25 = arith.constant dense<0.000000e+00> : vector<2x8x8xf32>
    %78 = tpu.matmul %75, %76, %cst_25 {dimension_numbers = #tpu.dot_dimension_numbers<[2], [2], [1], [1], [0, 0, 0, 1, 1, 1], [0], [0]>} : vector<2x8x8xf32>, vector<2x8x8xf32>, vector<2x8x8xf32> -> vector<2x8x8xf32>
    "tpu.trace_stop"() : () -> ()
    %79 = vector.broadcast %23 : vector<2x1x8xf32> to vector<2x8x8xf32>
    %80 = arith.addf %78, %79 : vector<2x8x8xf32>
    %cst_26 = arith.constant dense<0xFF800000> : vector<2x8xf32>
    %81 = vector.multi_reduction <maximumf>, %80, %cst_26 [2] : vector<2x8x8xf32> to vector<2x8xf32>
    %82 = vector.shape_cast %81 : vector<2x8xf32> to vector<2x8x1xf32>
    %83 = vector.broadcast %82 : vector<2x8x1xf32> to vector<2x8x8xf32>
    %84 = arith.subf %80, %83 : vector<2x8x8xf32>
    %85 = math.exp %84 : vector<2x8x8xf32>
    %cst_27 = arith.constant dense<0.000000e+00> : vector<2x8xf32>
    %86 = vector.multi_reduction <add>, %85, %cst_27 [2] : vector<2x8x8xf32> to vector<2x8xf32>
    %87 = vector.shape_cast %86 : vector<2x8xf32> to vector<2x8x1xf32>
    %88 = tpu.reciprocal %87 {approx = true} : vector<2x8x1xf32> -> vector<2x8x1xf32>
    %89 = vector.broadcast %88 : vector<2x8x1xf32> to vector<2x8x8xf32>
    %90 = arith.mulf %85, %89 : vector<2x8x8xf32>
    "tpu.trace_start"() <{level = 10 : i32, message = "bqk,bkd->bqd"}> : () -> ()
    %cst_28 = arith.constant dense<0.000000e+00> : vector<2x8x8xf32>
    %91 = tpu.matmul %90, %77, %cst_28 {dimension_numbers = #tpu.dot_dimension_numbers<[2], [1], [1], [2], [0, 0, 0, 1, 1, 2], [0], [0]>} : vector<2x8x8xf32>, vector<2x8x8xf32>, vector<2x8x8xf32> -> vector<2x8x8xf32>
    "tpu.trace_stop"() : () -> ()
    %92 = tpu.concatenate %40, %57, %74, %91 in 2 : vector<2x8x8xf32>, vector<2x8x8xf32>, vector<2x8x8xf32>, vector<2x8x8xf32> -> vector<2x8x32xf32>
    %93 = vector.shape_cast %92 : vector<2x8x32xf32> to vector<16x32xf32>
    %c0_29 = arith.constant 0 : index
    %c0_30 = arith.constant 0 : index
    %c0_31 = arith.constant 0 : index
    %94 = vector.load %arg11[%c0_29, %c0_30, %c0_31] : memref<1x6x32xf32, #tpu.memory_space<vmem>>, vector<1x6x32xf32>
    %95 = vector.shape_cast %94 : vector<1x6x32xf32> to vector<6x32xf32>
    %c0_32 = arith.constant 0 : index
    %c0_33 = arith.constant 0 : index
    %c0_34 = arith.constant 0 : index
    %96 = vector.load %arg7[%c0_32, %c0_33, %c0_34] : memref<1x32x32xf32, #tpu.memory_space<vmem>>, vector<1x32x32xf32>
    %97 = vector.shape_cast %96 : vector<1x32x32xf32> to vector<32x32xf32>
    %cst_35 = arith.constant dense<0.000000e+00> : vector<16x32xf32>
    %98 = tpu.matmul %93, %97, %cst_35 {dimension_numbers = #tpu.dot_dimension_numbers<[1], [0], [0], [1], [0, 0, 1, 1], [], []>} : vector<16x32xf32>, vector<32x32xf32>, vector<16x32xf32> -> vector<16x32xf32>
    %99 = vector.extract_strided_slice %95 {offsets = [0, 0], sizes = [1, 32], strides = [1, 1]} : vector<6x32xf32> to vector<1x32xf32>
    %100 = vector.broadcast %99 : vector<1x32xf32> to vector<16x32xf32>
    %101 = arith.addf %98, %100 : vector<16x32xf32>
    %102 = arith.addf %4, %101 : vector<16x32xf32>
    %103 = vector.extract_strided_slice %95 {offsets = [1, 0], sizes = [1, 32], strides = [1, 1]} : vector<6x32xf32> to vector<1x32xf32>
    %104 = vector.extract_strided_slice %95 {offsets = [2, 0], sizes = [1, 32], strides = [1, 1]} : vector<6x32xf32> to vector<1x32xf32>
    %cst_36 = arith.constant dense<0.000000e+00> : vector<16xf32>
    %105 = vector.multi_reduction <add>, %102, %cst_36 [1] : vector<16x32xf32> to vector<16xf32>
    %106 = vector.shape_cast %105 : vector<16xf32> to vector<16x1xf32>
    %cst_37 = arith.constant 3.200000e+01 : f32
    %107 = vector.broadcast %cst_37 : f32 to vector<16x1xf32>
    %108 = arith.divf %106, %107 : vector<16x1xf32>
    %109 = vector.broadcast %108 : vector<16x1xf32> to vector<16x32xf32>
    %110 = arith.subf %102, %109 : vector<16x32xf32>
    %111 = arith.mulf %110, %110 : vector<16x32xf32>
    %cst_38 = arith.constant dense<0.000000e+00> : vector<16xf32>
    %112 = vector.multi_reduction <add>, %111, %cst_38 [1] : vector<16x32xf32> to vector<16xf32>
    %113 = vector.shape_cast %112 : vector<16xf32> to vector<16x1xf32>
    %cst_39 = arith.constant 3.200000e+01 : f32
    %114 = vector.broadcast %cst_39 : f32 to vector<16x1xf32>
    %115 = arith.divf %113, %114 : vector<16x1xf32>
    %116 = vector.broadcast %108 : vector<16x1xf32> to vector<16x32xf32>
    %117 = arith.subf %102, %116 : vector<16x32xf32>
    %cst_40 = arith.constant 9.99999974E-6 : f32
    %118 = vector.broadcast %cst_40 : f32 to vector<16x1xf32>
    %119 = arith.addf %115, %118 : vector<16x1xf32>
    %120 = math.rsqrt %119 : vector<16x1xf32>
    %121 = vector.broadcast %120 : vector<16x1xf32> to vector<16x32xf32>
    %122 = arith.mulf %117, %121 : vector<16x32xf32>
    %123 = vector.broadcast %103 : vector<1x32xf32> to vector<16x32xf32>
    %124 = arith.mulf %122, %123 : vector<16x32xf32>
    %125 = vector.broadcast %104 : vector<1x32xf32> to vector<16x32xf32>
    %126 = arith.addf %124, %125 : vector<16x32xf32>
    %c0_41 = arith.constant 0 : index
    %c0_42 = arith.constant 0 : index
    %c0_43 = arith.constant 0 : index
    %127 = vector.load %arg8[%c0_41, %c0_42, %c0_43] : memref<1x32x128xf32, #tpu.memory_space<vmem>>, vector<1x32x128xf32>
    %128 = vector.shape_cast %127 : vector<1x32x128xf32> to vector<32x128xf32>
    %cst_44 = arith.constant dense<0.000000e+00> : vector<16x128xf32>
    %129 = tpu.matmul %126, %128, %cst_44 {dimension_numbers = #tpu.dot_dimension_numbers<[1], [0], [0], [1], [0, 0, 1, 1], [], []>} : vector<16x32xf32>, vector<32x128xf32>, vector<16x128xf32> -> vector<16x128xf32>
    %c0_45 = arith.constant 0 : index
    %c0_46 = arith.constant 0 : index
    %c0_47 = arith.constant 0 : index
    %130 = vector.load %arg9[%c0_45, %c0_46, %c0_47] : memref<1x1x128xf32, #tpu.memory_space<vmem>>, vector<1x1x128xf32>
    %131 = vector.shape_cast %130 : vector<1x1x128xf32> to vector<1x128xf32>
    %132 = vector.broadcast %131 : vector<1x128xf32> to vector<16x128xf32>
    %133 = arith.addf %129, %132 : vector<16x128xf32>
    %134 = arith.mulf %133, %133 : vector<16x128xf32>
    %135 = arith.mulf %133, %134 : vector<16x128xf32>
    %cst_48 = arith.constant 4.471500e-02 : f32
    %136 = vector.broadcast %cst_48 : f32 to vector<16x128xf32>
    %137 = arith.mulf %136, %135 : vector<16x128xf32>
    %138 = arith.addf %133, %137 : vector<16x128xf32>
    %cst_49 = arith.constant 0.797884583 : f32
    %139 = vector.broadcast %cst_49 : f32 to vector<16x128xf32>
    %140 = arith.mulf %139, %138 : vector<16x128xf32>
    %141 = math.tanh %140 : vector<16x128xf32>
    %cst_50 = arith.constant 1.000000e+00 : f32
    %142 = vector.broadcast %cst_50 : f32 to vector<16x128xf32>
    %143 = arith.addf %142, %141 : vector<16x128xf32>
    %cst_51 = arith.constant 5.000000e-01 : f32
    %144 = vector.broadcast %cst_51 : f32 to vector<16x128xf32>
    %145 = arith.mulf %144, %143 : vector<16x128xf32>
    %146 = arith.mulf %133, %145 : vector<16x128xf32>
    %c0_52 = arith.constant 0 : index
    %c0_53 = arith.constant 0 : index
    %c0_54 = arith.constant 0 : index
    %147 = vector.load %arg10[%c0_52, %c0_53, %c0_54] : memref<1x128x32xf32, #tpu.memory_space<vmem>>, vector<1x128x32xf32>
    %148 = vector.shape_cast %147 : vector<1x128x32xf32> to vector<128x32xf32>
    %cst_55 = arith.constant dense<0.000000e+00> : vector<16x32xf32>
    %149 = tpu.matmul %146, %148, %cst_55 {dimension_numbers = #tpu.dot_dimension_numbers<[1], [0], [0], [1], [0, 0, 1, 1], [], []>} : vector<16x128xf32>, vector<128x32xf32>, vector<16x32xf32> -> vector<16x32xf32>
    %150 = vector.extract_strided_slice %95 {offsets = [3, 0], sizes = [1, 32], strides = [1, 1]} : vector<6x32xf32> to vector<1x32xf32>
    %151 = vector.broadcast %150 : vector<1x32xf32> to vector<16x32xf32>
    %152 = arith.addf %149, %151 : vector<16x32xf32>
    %153 = arith.addf %126, %152 : vector<16x32xf32>
    %154 = vector.extract_strided_slice %95 {offsets = [4, 0], sizes = [1, 32], strides = [1, 1]} : vector<6x32xf32> to vector<1x32xf32>
    %155 = vector.extract_strided_slice %95 {offsets = [5, 0], sizes = [1, 32], strides = [1, 1]} : vector<6x32xf32> to vector<1x32xf32>
    %cst_56 = arith.constant dense<0.000000e+00> : vector<16xf32>
    %156 = vector.multi_reduction <add>, %153, %cst_56 [1] : vector<16x32xf32> to vector<16xf32>
    %157 = vector.shape_cast %156 : vector<16xf32> to vector<16x1xf32>
    %cst_57 = arith.constant 3.200000e+01 : f32
    %158 = vector.broadcast %cst_57 : f32 to vector<16x1xf32>
    %159 = arith.divf %157, %158 : vector<16x1xf32>
    %160 = vector.broadcast %159 : vector<16x1xf32> to vector<16x32xf32>
    %161 = arith.subf %153, %160 : vector<16x32xf32>
    %162 = arith.mulf %161, %161 : vector<16x32xf32>
    %cst_58 = arith.constant dense<0.000000e+00> : vector<16xf32>
    %163 = vector.multi_reduction <add>, %162, %cst_58 [1] : vector<16x32xf32> to vector<16xf32>
    %164 = vector.shape_cast %163 : vector<16xf32> to vector<16x1xf32>
    %cst_59 = arith.constant 3.200000e+01 : f32
    %165 = vector.broadcast %cst_59 : f32 to vector<16x1xf32>
    %166 = arith.divf %164, %165 : vector<16x1xf32>
    %167 = vector.broadcast %159 : vector<16x1xf32> to vector<16x32xf32>
    %168 = arith.subf %153, %167 : vector<16x32xf32>
    %cst_60 = arith.constant 9.99999974E-6 : f32
    %169 = vector.broadcast %cst_60 : f32 to vector<16x1xf32>
    %170 = arith.addf %166, %169 : vector<16x1xf32>
    %171 = math.rsqrt %170 : vector<16x1xf32>
    %172 = vector.broadcast %171 : vector<16x1xf32> to vector<16x32xf32>
    %173 = arith.mulf %168, %172 : vector<16x32xf32>
    %174 = vector.broadcast %154 : vector<1x32xf32> to vector<16x32xf32>
    %175 = arith.mulf %173, %174 : vector<16x32xf32>
    %176 = vector.broadcast %155 : vector<1x32xf32> to vector<16x32xf32>
    %177 = arith.addf %175, %176 : vector<16x32xf32>
    %178 = vector.shape_cast %177 : vector<16x32xf32> to vector<2x8x32xf32>
    %c0_61 = arith.constant 0 : index
    %c0_62 = arith.constant 0 : index
    %c0_63 = arith.constant 0 : index
    %179 = vector.load %arg16[%c0_61, %c0_62, %c0_63] : memref<2x8x32xf32, #tpu.memory_space<vmem>>, vector<2x8x32xf32>
    tpu.vector_store %arg16[%c0_61, %c0_62, %c0_63], %178 {strides = array<i32>} : memref<2x8x32xf32, #tpu.memory_space<vmem>>, vector<2x8x32xf32>,
    %c1_i32 = arith.constant 1 : i32
    %180 = arith.cmpi eq, %arg0, %c1_i32 : i32
    %181 = arith.extui %180 : i1 to i32
    %c0_i32_64 = arith.constant 0 : i32
    %182 = arith.cmpi ne, %181, %c0_i32_64 : i32
    scf.if %182 {
      %183 = vector.shape_cast %177 : vector<16x32xf32> to vector<2x8x32xf32>
      %c0_65 = arith.constant 0 : index
      %c0_66 = arith.constant 0 : index
      %184 = vector.load %arg3[%c0_65, %c0_66] : memref<2x8xf32, #tpu.memory_space<vmem>>, vector<2x8xf32>
      %185 = vector.extract_strided_slice %183 {offsets = [0, 0, 0], sizes = [2, 1, 32], strides = [1, 1, 1]} : vector<2x8x32xf32> to vector<2x1x32xf32>
      %186 = vector.shape_cast %185 : vector<2x1x32xf32> to vector<2x32xf32>
      %187 = vector.shape_cast %184 : vector<2x8xf32> to vector<2x8x1xf32>
      %188 = vector.broadcast %187 : vector<2x8x1xf32> to vector<2x8x32xf32>
      %189 = arith.mulf %183, %188 : vector<2x8x32xf32>
      %cst_67 = arith.constant dense<0.000000e+00> : vector<2x32xf32>
      %190 = vector.multi_reduction <add>, %189, %cst_67 [1] : vector<2x8x32xf32> to vector<2x32xf32>
      %cst_68 = arith.constant dense<0.000000e+00> : vector<2xf32>
      %191 = vector.multi_reduction <add>, %184, %cst_68 [1] : vector<2x8xf32> to vector<2xf32>
      %192 = vector.shape_cast %191 : vector<2xf32> to vector<2x1xf32>
      %cst_69 = arith.constant 1.000000e+00 : f32
      %193 = vector.broadcast %cst_69 : f32 to vector<2x1xf32>
      %194 = arith.maximumf %192, %193 : vector<2x1xf32>
      %195 = tpu.reciprocal %194 {approx = true} : vector<2x1xf32> -> vector<2x1xf32>
      %196 = vector.broadcast %195 : vector<2x1xf32> to vector<2x32xf32>
      %197 = arith.mulf %190, %196 : vector<2x32xf32>
      %198 = tpu.concatenate %186, %197 in 1 : vector<2x32xf32>, vector<2x32xf32> -> vector<2x64xf32>
      %c0_70 = arith.constant 0 : index
      %c0_71 = arith.constant 0 : index
      %199 = vector.load %arg12[%c0_70, %c0_71] : memref<2x64xf32, #tpu.memory_space<vmem>>, vector<1x64xf32>
      %c1 = arith.constant 1 : index
      %c0_72 = arith.constant 0 : index
      %200 = vector.load %arg12[%c1, %c0_72] : memref<2x64xf32, #tpu.memory_space<vmem>>, vector<1x64xf32>
      %cst_73 = arith.constant dense<0.000000e+00> : vector<2xf32>
      %201 = vector.multi_reduction <add>, %198, %cst_73 [1] : vector<2x64xf32> to vector<2xf32>
      %202 = vector.shape_cast %201 : vector<2xf32> to vector<2x1xf32>
      %cst_74 = arith.constant 6.400000e+01 : f32
      %203 = vector.broadcast %cst_74 : f32 to vector<2x1xf32>
      %204 = arith.divf %202, %203 : vector<2x1xf32>
      %205 = vector.broadcast %204 : vector<2x1xf32> to vector<2x64xf32>
      %206 = arith.subf %198, %205 : vector<2x64xf32>
      %207 = arith.mulf %206, %206 : vector<2x64xf32>
      %cst_75 = arith.constant dense<0.000000e+00> : vector<2xf32>
      %208 = vector.multi_reduction <add>, %207, %cst_75 [1] : vector<2x64xf32> to vector<2xf32>
      %209 = vector.shape_cast %208 : vector<2xf32> to vector<2x1xf32>
      %cst_76 = arith.constant 6.400000e+01 : f32
      %210 = vector.broadcast %cst_76 : f32 to vector<2x1xf32>
      %211 = arith.divf %209, %210 : vector<2x1xf32>
      %212 = vector.broadcast %204 : vector<2x1xf32> to vector<2x64xf32>
      %213 = arith.subf %198, %212 : vector<2x64xf32>
      %cst_77 = arith.constant 9.99999974E-6 : f32
      %214 = vector.broadcast %cst_77 : f32 to vector<2x1xf32>
      %215 = arith.addf %211, %214 : vector<2x1xf32>
      %216 = math.rsqrt %215 : vector<2x1xf32>
      %217 = vector.broadcast %216 : vector<2x1xf32> to vector<2x64xf32>
      %218 = arith.mulf %213, %217 : vector<2x64xf32>
      %219 = vector.broadcast %199 : vector<1x64xf32> to vector<2x64xf32>
      %220 = arith.mulf %218, %219 : vector<2x64xf32>
      %221 = vector.broadcast %200 : vector<1x64xf32> to vector<2x64xf32>
      %222 = arith.addf %220, %221 : vector<2x64xf32>
      %c0_78 = arith.constant 0 : index
      %c0_79 = arith.constant 0 : index
      %223 = vector.load %arg13[%c0_78, %c0_79] : memref<64x1xf32, #tpu.memory_space<vmem>>, vector<64x1xf32>
      %cst_80 = arith.constant dense<0.000000e+00> : vector<2x1xf32>
      %224 = tpu.matmul %222, %223, %cst_80 {dimension_numbers = #tpu.dot_dimension_numbers<[1], [0], [0], [1], [0, 0, 1, 1], [], []>} : vector<2x64xf32>, vector<64x1xf32>, vector<2x1xf32> -> vector<2x1xf32>
      %c0_81 = arith.constant 0 : index
      %c0_82 = arith.constant 0 : index
      %225 = vector.load %arg14[%c0_81, %c0_82] : memref<1x1xf32, #tpu.memory_space<vmem>>, vector<1x1xf32>
      %226 = vector.broadcast %225 : vector<1x1xf32> to vector<2x1xf32>
      %227 = arith.addf %224, %226 : vector<2x1xf32>
      %c0_83 = arith.constant 0 : index
      %c0_84 = arith.constant 0 : index
      %228 = vector.load %arg15[%c0_83, %c0_84] : memref<2x1xf32, #tpu.memory_space<vmem>>, vector<2x1xf32>
      tpu.vector_store %arg15[%c0_83, %c0_84], %227 {strides = array<i32>} : memref<2x1xf32, #tpu.memory_space<vmem>>, vector<2x1xf32>,
    } else {
    }
    return
  }
  func.func @transform_0(%arg0: i32) -> (i32, i32, i32) {
    %c0_i32 = arith.constant 0 : i32
    %c0_i32_0 = arith.constant 0 : i32
    %c0_i32_1 = arith.constant 0 : i32
    %c0_i32_2 = arith.constant 0 : i32
    return %c0_i32, %c0_i32_0, %c0_i32_1 : i32, i32, i32
  }
  func.func @transform_1(%arg0: i32) -> (i32, i32) {
    %c0_i32 = arith.constant 0 : i32
    %c0_i32_0 = arith.constant 0 : i32
    %c0_i32_1 = arith.constant 0 : i32
    return %c0_i32, %c0_i32_0 : i32, i32
  }
  func.func @transform_2(%arg0: i32) -> (i32, i32) {
    %c0_i32 = arith.constant 0 : i32
    %c0_i32_0 = arith.constant 0 : i32
    %c0_i32_1 = arith.constant 0 : i32
    return %c0_i32, %c0_i32_0 : i32, i32
  }
  func.func @transform_3(%arg0: i32) -> (i32, i32) {
    %c0_i32 = arith.constant 0 : i32
    %c0_i32_0 = arith.constant 0 : i32
    %c0_i32_1 = arith.constant 0 : i32
    return %c0_i32, %c0_i32_0 : i32, i32
  }
  func.func @transform_4(%arg0: i32) -> (i32, i32, i32) {
    %c0_i32 = arith.constant 0 : i32
    %c0_i32_0 = arith.constant 0 : i32
    %c0_i32_1 = arith.constant 0 : i32
    return %arg0, %c0_i32, %c0_i32_0 : i32, i32, i32
  }
  func.func @transform_5(%arg0: i32) -> (i32, i32, i32) {
    %c0_i32 = arith.constant 0 : i32
    %c0_i32_0 = arith.constant 0 : i32
    %c0_i32_1 = arith.constant 0 : i32
    return %arg0, %c0_i32, %c0_i32_0 : i32, i32, i32
  }
  func.func @transform_6(%arg0: i32) -> (i32, i32, i32) {
    %c0_i32 = arith.constant 0 : i32
    %c0_i32_0 = arith.constant 0 : i32
    %c0_i32_1 = arith.constant 0 : i32
    return %arg0, %c0_i32, %c0_i32_0 : i32, i32, i32
  }
  func.func @transform_7(%arg0: i32) -> (i32, i32, i32) {
    %c0_i32 = arith.constant 0 : i32
    %c0_i32_0 = arith.constant 0 : i32
    %c0_i32_1 = arith.constant 0 : i32
    return %arg0, %c0_i32, %c0_i32_0 : i32, i32, i32
  }
  func.func @transform_8(%arg0: i32) -> (i32, i32, i32) {
    %c0_i32 = arith.constant 0 : i32
    %c0_i32_0 = arith.constant 0 : i32
    %c0_i32_1 = arith.constant 0 : i32
    return %arg0, %c0_i32, %c0_i32_0 : i32, i32, i32
  }
  func.func @transform_9(%arg0: i32) -> (i32, i32, i32) {
    %c0_i32 = arith.constant 0 : i32
    %c0_i32_0 = arith.constant 0 : i32
    %c0_i32_1 = arith.constant 0 : i32
    return %arg0, %c0_i32, %c0_i32_0 : i32, i32, i32
  }
  func.func @transform_10(%arg0: i32) -> (i32, i32, i32) {
    %c0_i32 = arith.constant 0 : i32
    %c0_i32_0 = arith.constant 0 : i32
    %c0_i32_1 = arith.constant 0 : i32
    return %arg0, %c0_i32, %c0_i32_0 : i32, i32, i32
  }
  func.func @transform_11(%arg0: i32) -> (i32, i32) {
    %c0_i32 = arith.constant 0 : i32
    %c0_i32_0 = arith.constant 0 : i32
    %c0_i32_1 = arith.constant 0 : i32
    return %c0_i32, %c0_i32_0 : i32, i32
  }
  func.func @transform_12(%arg0: i32) -> (i32, i32) {
    %c0_i32 = arith.constant 0 : i32
    %c0_i32_0 = arith.constant 0 : i32
    %c0_i32_1 = arith.constant 0 : i32
    return %c0_i32, %c0_i32_0 : i32, i32
  }
  func.func @transform_13(%arg0: i32) -> (i32, i32) {
    %c0_i32 = arith.constant 0 : i32
    %c0_i32_0 = arith.constant 0 : i32
    %c0_i32_1 = arith.constant 0 : i32
    return %c0_i32, %c0_i32_0 : i32, i32
  }
  func.func @transform_14(%arg0: i32) -> (i32, i32) {
    %c0_i32 = arith.constant 0 : i32
    %c0_i32_0 = arith.constant 0 : i32
    %c0_i32_1 = arith.constant 0 : i32
    return %c0_i32, %c0_i32_0 : i32, i32
  }
}

</mosaic_0001>

<llo_original>
// kernel: tpu_custom_call.1
$region0: #{tpu_custom_call.1}
  #allocation0 [shape = 'u32[]', space=smem, size = 0x4, offset = 0x4, fixed_abs, tag = 'smem constant byte address 0x4 - core index']
  #allocation1 [shape = 'u32[72,128]{1,0:T(1,128)}', space=vmem, size = 0x9000, scoped, tag = 'internal scratch']
  #allocation2 [shape = 'f32[2,8,32]{2,1,0:T(8,128)}', space=vmem, size = 0x2000, scoped, tag = 'scratch operand']
  #allocation3 [shape = 'f32[1,1]{1,0:T(1,128)S(1)}', space=vmem, size = 0x200, scoped, tag = 'scoped memory for tpu_custom_call.1']
  %s0 = inlined_call_operand.vmem [shape: f32[2,8,32], index: 0, kind: input, shape index: {}]
  %s1 = inlined_call_operand.vmem [shape: f32[2,8], index: 1, kind: input, shape index: {}]
  %s2 = inlined_call_operand.vmem [shape: f32[2,8], index: 2, kind: input, shape index: {}]
  %s3 = inlined_call_operand.vmem [shape: f32[2,32], index: 3, kind: input, shape index: {}]
  %s4 = inlined_call_operand.vmem [shape: f32[2,32,96], index: 4, kind: input, shape index: {}]
  %s5 = inlined_call_operand.vmem [shape: f32[2,1,96], index: 5, kind: input, shape index: {}]
  %s6 = inlined_call_operand.vmem [shape: f32[2,32,32], index: 6, kind: input, shape index: {}]
  %s7 = inlined_call_operand.vmem [shape: f32[2,32,128], index: 7, kind: input, shape index: {}]
  %s8 = inlined_call_operand.vmem [shape: f32[2,1,128], index: 8, kind: input, shape index: {}]
  %s9 = inlined_call_operand.vmem [shape: f32[2,128,32], index: 9, kind: input, shape index: {}]
  %s10 = inlined_call_operand.vmem [shape: f32[2,6,32], index: 10, kind: input, shape index: {}]
  %s11 = inlined_call_operand.vmem [shape: f32[2,64], index: 11, kind: input, shape index: {}]
  %s12 = inlined_call_operand.vmem [shape: f32[64,1], index: 12, kind: input, shape index: {}]
  %s13 = inlined_call_operand.<no memory space> [shape: f32[1,1], index: 13, kind: input, shape index: {}]
  %s14 = inlined_call_operand.vmem [shape: f32[2,1], index: 14, kind: output, shape index: {}]
  %s15 = sld [smem:[#allocation0]]
  $region97: #{tpu_custom_call.1} parent=0
    _
  %s17 = ssub.s32 1, %s15
  %s18 = scalar_select 0, %s17, %s15
  %v19 = vstv %s13
  %20 = vst [vmem:[#allocation3] sm:$0x1] %v19
  loop: start=0, step=1, limit=4
  $region2: #{tpu_custom_call.1} parent=0 // loop_pre_header
    _
  $region3: #{tpu_custom_call.1} parent=0 // loop_header
    %s22 = sphi 0, %s26
    %p23 = scmp.ge.s32.totalorder %s22, 4
    %s30 = sphi 0, %s30
    %s32 = sphi 0, %s30
    %s33 = sphi 0, %s32
    %s47 = sphi 0, %s33
    %s51 = sphi 0, %s51
    %s53 = sphi 0, %s51
    %s54 = sphi 0, %s53
    %s68 = sphi 0, %s54
    %s72 = sphi 0, %s72
    %s74 = sphi 0, %s72
    %s75 = sphi 0, %s74
    %s89 = sphi 0, %s75
    %s93 = sphi 0, %s93
    %s95 = sphi 0, %s93
    %s96 = sphi 0, %s95
    %s110 = sphi 0, %s96
    %s116 = sphi 0, %s118
    %s119 = sphi 0, %s116
    %s120 = sphi 0, %s119
    %s136 = sphi 0, %s120
    %s142 = sphi 0, %s144
    %s145 = sphi 0, %s142
    %s146 = sphi 0, %s145
    %s162 = sphi 0, %s146
    %s168 = sphi 0, %s170
    %s171 = sphi 0, %s168
    %s172 = sphi 0, %s171
    %s188 = sphi 0, %s172
    %s194 = sphi 0, %s196
    %s197 = sphi 0, %s194
    %s198 = sphi 0, %s197
    %s214 = sphi 0, %s198
    %s220 = sphi 0, %s222
    %s223 = sphi 0, %s220
    %s224 = sphi 0, %s223
    %s240 = sphi 0, %s224
    %s246 = sphi 0, %s248
    %s249 = sphi 0, %s246
    %s250 = sphi 0, %s249
    %s266 = sphi 0, %s250
    %s272 = sphi 0, %s274
    %s275 = sphi 0, %s272
    %s276 = sphi 0, %s275
    %s292 = sphi 0, %s276
    %s296 = sphi 0, %s296
    %s298 = sphi 0, %s296
    %s299 = sphi 0, %s298
    %s313 = sphi 0, %s299
    %s317 = sphi 0, %s317
    %s319 = sphi 0, %s317
    %s320 = sphi 0, %s319
    %s334 = sphi 0, %s320
    %s338 = sphi 0, %s338
    %s340 = sphi 0, %s338
    %s341 = sphi 0, %s340
    %s355 = sphi 0, %s341
    %s359 = sphi 0, %s359
    %s361 = sphi 0, %s359
    %s362 = sphi 0, %s361
    %s376 = sphi 0, %s362
  $region4: #{tpu_custom_call.1} parent=0 // loop_header_branch
    %25 = sbr.rel (%p23) target = $region8
  $region5: #{tpu_custom_call.1} parent=0 // loop_body
    %s27 = ssub.s32 %s22, 1
    %s28 = ssub.s32 %s22, 2
    %s29 = sadd.s32 %s22, 1
    %s31 = sadd.s32 %s30, 1
    %p34 = scmp.eq.s32.totalorder %s22, 1
    %p35 = scmp.ne.s32.totalorder %s30, %s32
    %p36 = scmp.eq.s32.totalorder %s22, 0
    %p37 = por %p35, %p36
    %p38 = scmp.ne.s32.totalorder %s30, %s32
    %p39 = scmp.eq.s32.totalorder %s27, 1
    %p40 = por %p38, %p39
    %p41 = scmp.ne.s32.totalorder %s32, %s33
    %p42 = scmp.eq.s32.totalorder %s27, 0
    %p43 = por %p41, %p42
    %p44 = scmp.ne.s32.totalorder %s32, %s33
    %p45 = scmp.eq.s32.totalorder %s28, 1
    %p46 = por %p44, %p45
    %p48 = scmp.ne.s32.totalorder %s33, %s47
    %p49 = scmp.eq.s32.totalorder %s28, 0
    %p50 = por %p48, %p49
    %s52 = sadd.s32 %s51, 1
    %p55 = scmp.eq.s32.totalorder %s22, 1
    %p56 = scmp.ne.s32.totalorder %s51, %s53
    %p57 = scmp.eq.s32.totalorder %s22, 0
    %p58 = por %p56, %p57
    %p59 = scmp.ne.s32.totalorder %s51, %s53
    %p60 = scmp.eq.s32.totalorder %s27, 1
    %p61 = por %p59, %p60
    %p62 = scmp.ne.s32.totalorder %s53, %s54
    %p63 = scmp.eq.s32.totalorder %s27, 0
    %p64 = por %p62, %p63
    %p65 = scmp.ne.s32.totalorder %s53, %s54
    %p66 = scmp.eq.s32.totalorder %s28, 1
    %p67 = por %p65, %p66
    %p69 = scmp.ne.s32.totalorder %s54, %s68
    %p70 = scmp.eq.s32.totalorder %s28, 0
    %p71 = por %p69, %p70
    %s73 = sadd.s32 %s72, 1
    %p76 = scmp.eq.s32.totalorder %s22, 1
    %p77 = scmp.ne.s32.totalorder %s72, %s74
    %p78 = scmp.eq.s32.totalorder %s22, 0
    %p79 = por %p77, %p78
    %p80 = scmp.ne.s32.totalorder %s72, %s74
    %p81 = scmp.eq.s32.totalorder %s27, 1
    %p82 = por %p80, %p81
    %p83 = scmp.ne.s32.totalorder %s74, %s75
    %p84 = scmp.eq.s32.totalorder %s27, 0
    %p85 = por %p83, %p84
    %p86 = scmp.ne.s32.totalorder %s74, %s75
    %p87 = scmp.eq.s32.totalorder %s28, 1
    %p88 = por %p86, %p87
    %p90 = scmp.ne.s32.totalorder %s75, %s89
    %p91 = scmp.eq.s32.totalorder %s28, 0
    %p92 = por %p90, %p91
    %s94 = sadd.s32 %s93, 1
    %p97 = scmp.eq.s32.totalorder %s22, 1
    %p98 = scmp.ne.s32.totalorder %s93, %s95
    %p99 = scmp.eq.s32.totalorder %s22, 0
    %p100 = por %p98, %p99
    %p101 = scmp.ne.s32.totalorder %s93, %s95
    %p102 = scmp.eq.s32.totalorder %s27, 1
    %p103 = por %p101, %p102
    %p104 = scmp.ne.s32.totalorder %s95, %s96
    %p105 = scmp.eq.s32.totalorder %s27, 0
    %p106 = por %p104, %p105
    %p107 = scmp.ne.s32.totalorder %s95, %s96
    %p108 = scmp.eq.s32.totalorder %s28, 1
    %p109 = por %p107, %p108
    %p111 = scmp.ne.s32.totalorder %s96, %s110
    %p112 = scmp.eq.s32.totalorder %s28, 0
    %p113 = por %p111, %p112
    %s114 = ssub.s32 %s22, %s29
    %p115 = scmp.eq.s32.totalorder %s114, 0
    %s117 = sadd.s32 %s116, 1
    %s118 = scalar_select %p115, %s116, %s117
    %p121 = pneg %p115
    %p122 = scmp.eq.s32.totalorder %s22, 1
    %p123 = por %p121, %p122
    %p124 = scmp.ne.s32.totalorder %s116, %s119
    %p125 = scmp.eq.s32.totalorder %s22, 0
    %p126 = por %p124, %p125
    %p127 = scmp.ne.s32.totalorder %s116, %s119
    %p128 = scmp.eq.s32.totalorder %s27, 1
    %p129 = por %p127, %p128
    %p130 = scmp.ne.s32.totalorder %s119, %s120
    %p131 = scmp.eq.s32.totalorder %s27, 0
    %p132 = por %p130, %p131
    %p133 = scmp.ne.s32.totalorder %s119, %s120
    %p134 = scmp.eq.s32.totalorder %s28, 1
    %p135 = por %p133, %p134
    %p137 = scmp.ne.s32.totalorder %s120, %s136
    %p138 = scmp.eq.s32.totalorder %s28, 0
    %p139 = por %p137, %p138
    %s140 = ssub.s32 %s22, %s29
    %p141 = scmp.eq.s32.totalorder %s140, 0
    %s143 = sadd.s32 %s142, 1
    %s144 = scalar_select %p141, %s142, %s143
    %p147 = pneg %p141
    %p148 = scmp.eq.s32.totalorder %s22, 1
    %p149 = por %p147, %p148
    %p150 = scmp.ne.s32.totalorder %s142, %s145
    %p151 = scmp.eq.s32.totalorder %s22, 0
    %p152 = por %p150, %p151
    %p153 = scmp.ne.s32.totalorder %s142, %s145
    %p154 = scmp.eq.s32.totalorder %s27, 1
    %p155 = por %p153, %p154
    %p156 = scmp.ne.s32.totalorder %s145, %s146
    %p157 = scmp.eq.s32.totalorder %s27, 0
    %p158 = por %p156, %p157
    %p159 = scmp.ne.s32.totalorder %s145, %s146
    %p160 = scmp.eq.s32.totalorder %s28, 1
    %p161 = por %p159, %p160
    %p163 = scmp.ne.s32.totalorder %s146, %s162
    %p164 = scmp.eq.s32.totalorder %s28, 0
    %p165 = por %p163, %p164
    %s166 = ssub.s32 %s22, %s29
    %p167 = scmp.eq.s32.totalorder %s166, 0
    %s169 = sadd.s32 %s168, 1
    %s170 = scalar_select %p167, %s168, %s169
    %p173 = pneg %p167
    %p174 = scmp.eq.s32.totalorder %s22, 1
    %p175 = por %p173, %p174
    %p176 = scmp.ne.s32.totalorder %s168, %s171
    %p177 = scmp.eq.s32.totalorder %s22, 0
    %p178 = por %p176, %p177
    %p179 = scmp.ne.s32.totalorder %s168, %s171
    %p180 = scmp.eq.s32.totalorder %s27, 1
    %p181 = por %p179, %p180
    %p182 = scmp.ne.s32.totalorder %s171, %s172
    %p183 = scmp.eq.s32.totalorder %s27, 0
    %p184 = por %p182, %p183
    %p185 = scmp.ne.s32.totalorder %s171, %s172
    %p186 = scmp.eq.s32.totalorder %s28, 1
    %p187 = por %p185, %p186
    %p189 = scmp.ne.s32.totalorder %s172, %s188
    %p190 = scmp.eq.s32.totalorder %s28, 0
    %p191 = por %p189, %p190
    %s192 = ssub.s32 %s22, %s29
    %p193 = scmp.eq.s32.totalorder %s192, 0
    %s195 = sadd.s32 %s194, 1
    %s196 = scalar_select %p193, %s194, %s195
    %p199 = pneg %p193
    %p200 = scmp.eq.s32.totalorder %s22, 1
    %p201 = por %p199, %p200
    %p202 = scmp.ne.s32.totalorder %s194, %s197
    %p203 = scmp.eq.s32.totalorder %s22, 0
    %p204 = por %p202, %p203
    %p205 = scmp.ne.s32.totalorder %s194, %s197
    %p206 = scmp.eq.s32.totalorder %s27, 1
    %p207 = por %p205, %p206
    %p208 = scmp.ne.s32.totalorder %s197, %s198
    %p209 = scmp.eq.s32.totalorder %s27, 0
    %p210 = por %p208, %p209
    %p211 = scmp.ne.s32.totalorder %s197, %s198
    %p212 = scmp.eq.s32.totalorder %s28, 1
    %p213 = por %p211, %p212
    %p215 = scmp.ne.s32.totalorder %s198, %s214
    %p216 = scmp.eq.s32.totalorder %s28, 0
    %p217 = por %p215, %p216
    %s218 = ssub.s32 %s22, %s29
    %p219 = scmp.eq.s32.totalorder %s218, 0
    %s221 = sadd.s32 %s220, 1
    %s222 = scalar_select %p219, %s220, %s221
    %p225 = pneg %p219
    %p226 = scmp.eq.s32.totalorder %s22, 1
    %p227 = por %p225, %p226
    %p228 = scmp.ne.s32.totalorder %s220, %s223
    %p229 = scmp.eq.s32.totalorder %s22, 0
    %p230 = por %p228, %p229
    %p231 = scmp.ne.s32.totalorder %s220, %s223
    %p232 = scmp.eq.s32.totalorder %s27, 1
    %p233 = por %p231, %p232
    %p234 = scmp.ne.s32.totalorder %s223, %s224
    %p235 = scmp.eq.s32.totalorder %s27, 0
    %p236 = por %p234, %p235
    %p237 = scmp.ne.s32.totalorder %s223, %s224
    %p238 = scmp.eq.s32.totalorder %s28, 1
    %p239 = por %p237, %p238
    %p241 = scmp.ne.s32.totalorder %s224, %s240
    %p242 = scmp.eq.s32.totalorder %s28, 0
    %p243 = por %p241, %p242
    %s244 = ssub.s32 %s22, %s29
    %p245 = scmp.eq.s32.totalorder %s244, 0
    %s247 = sadd.s32 %s246, 1
    %s248 = scalar_select %p245, %s246, %s247
    %p251 = pneg %p245
    %p252 = scmp.eq.s32.totalorder %s22, 1
    %p253 = por %p251, %p252
    %p254 = scmp.ne.s32.totalorder %s246, %s249
    %p255 = scmp.eq.s32.totalorder %s22, 0
    %p256 = por %p254, %p255
    %p257 = scmp.ne.s32.totalorder %s246, %s249
    %p258 = scmp.eq.s32.totalorder %s27, 1
    %p259 = por %p257, %p258
    %p260 = scmp.ne.s32.totalorder %s249, %s250
    %p261 = scmp.eq.s32.totalorder %s27, 0
    %p262 = por %p260, %p261
    %p263 = scmp.ne.s32.totalorder %s249, %s250
    %p264 = scmp.eq.s32.totalorder %s28, 1
    %p265 = por %p263, %p264
    %p267 = scmp.ne.s32.totalorder %s250, %s266
    %p268 = scmp.eq.s32.totalorder %s28, 0
    %p269 = por %p267, %p268
    %s270 = ssub.s32 %s22, %s29
    %p271 = scmp.eq.s32.totalorder %s270, 0
    %s273 = sadd.s32 %s272, 1
    %s274 = scalar_select %p271, %s272, %s273
    %p277 = pneg %p271
    %p278 = scmp.eq.s32.totalorder %s22, 1
    %p279 = por %p277, %p278
    %p280 = scmp.ne.s32.totalorder %s272, %s275
    %p281 = scmp.eq.s32.totalorder %s22, 0
    %p282 = por %p280, %p281
    %p283 = scmp.ne.s32.totalorder %s272, %s275
    %p284 = scmp.eq.s32.totalorder %s27, 1
    %p285 = por %p283, %p284
    %p286 = scmp.ne.s32.totalorder %s275, %s276
    %p287 = scmp.eq.s32.totalorder %s27, 0
    %p288 = por %p286, %p287
    %p289 = scmp.ne.s32.totalorder %s275, %s276
    %p290 = scmp.eq.s32.totalorder %s28, 1
    %p291 = por %p289, %p290
    %p293 = scmp.ne.s32.totalorder %s276, %s292
    %p294 = scmp.eq.s32.totalorder %s28, 0
    %p295 = por %p293, %p294
    %s297 = sadd.s32 %s296, 1
    %p300 = scmp.eq.s32.totalorder %s22, 1
    %p301 = scmp.ne.s32.totalorder %s296, %s298
    %p302 = scmp.eq.s32.totalorder %s22, 0
    %p303 = por %p301, %p302
    %p304 = scmp.ne.s32.totalorder %s296, %s298
    %p305 = scmp.eq.s32.totalorder %s27, 1
    %p306 = por %p304, %p305
    %p307 = scmp.ne.s32.totalorder %s298, %s299
    %p308 = scmp.eq.s32.totalorder %s27, 0
    %p309 = por %p307, %p308
    %p310 = scmp.ne.s32.totalorder %s298, %s299
    %p311 = scmp.eq.s32.totalorder %s28, 1
    %p312 = por %p310, %p311
    %p314 = scmp.ne.s32.totalorder %s299, %s313
    %p315 = scmp.eq.s32.totalorder %s28, 0
    %p316 = por %p314, %p315
    %s318 = sadd.s32 %s317, 1
    %p321 = scmp.eq.s32.totalorder %s22, 1
    %p322 = scmp.ne.s32.totalorder %s317, %s319
    %p323 = scmp.eq.s32.totalorder %s22, 0
    %p324 = por %p322, %p323
    %p325 = scmp.ne.s32.totalorder %s317, %s319
    %p326 = scmp.eq.s32.totalorder %s27, 1
    %p327 = por %p325, %p326
    %p328 = scmp.ne.s32.totalorder %s319, %s320
    %p329 = scmp.eq.s32.totalorder %s27, 0
    %p330 = por %p328, %p329
    %p331 = scmp.ne.s32.totalorder %s319, %s320
    %p332 = scmp.eq.s32.totalorder %s28, 1
    %p333 = por %p331, %p332
    %p335 = scmp.ne.s32.totalorder %s320, %s334
    %p336 = scmp.eq.s32.totalorder %s28, 0
    %p337 = por %p335, %p336
    %s339 = sadd.s32 %s338, 1
    %p342 = scmp.eq.s32.totalorder %s22, 1
    %p343 = scmp.ne.s32.totalorder %s338, %s340
    %p344 = scmp.eq.s32.totalorder %s22, 0
    %p345 = por %p343, %p344
    %p346 = scmp.ne.s32.totalorder %s338, %s340
    %p347 = scmp.eq.s32.totalorder %s27, 1
    %p348 = por %p346, %p347
    %p349 = scmp.ne.s32.totalorder %s340, %s341
    %p350 = scmp.eq.s32.totalorder %s27, 0
    %p351 = por %p349, %p350
    %p352 = scmp.ne.s32.totalorder %s340, %s341
    %p353 = scmp.eq.s32.totalorder %s28, 1
    %p354 = por %p352, %p353
    %p356 = scmp.ne.s32.totalorder %s341, %s355
    %p357 = scmp.eq.s32.totalorder %s28, 0
    %p358 = por %p356, %p357
    %s360 = sadd.s32 %s359, 1
    %p363 = scmp.eq.s32.totalorder %s22, 1
    %p364 = scmp.ne.s32.totalorder %s359, %s361
    %p365 = scmp.eq.s32.totalorder %s22, 0
    %p366 = por %p364, %p365
    %p367 = scmp.ne.s32.totalorder %s359, %s361
    %p368 = scmp.eq.s32.totalorder %s27, 1
    %p369 = por %p367, %p368
    %p370 = scmp.ne.s32.totalorder %s361, %s362
    %p371 = scmp.eq.s32.totalorder %s27, 0
    %p372 = por %p370, %p371
    %p373 = scmp.ne.s32.totalorder %s361, %s362
    %p374 = scmp.eq.s32.totalorder %s28, 1
    %p375 = por %p373, %p374
    %p377 = scmp.ne.s32.totalorder %s362, %s376
    %p378 = scmp.eq.s32.totalorder %s28, 0
    %p379 = por %p377, %p378
    %p380 = scmp.le.s32.totalorder 1, %s22
    %p381 = scmp.lt.s32.totalorder %s22, 3
    %p382 = pnand %p380, %p381
    %p383 = pneg %p382
    // Predicated region
    $region9: #{tpu_custom_call.1} parent=5 // pred_check
      _
    $region10: #{tpu_custom_call.1} parent=5 // pred_check_branch
      %385 = sbr.rel (%p382) target = $region12
    $region11: #{tpu_custom_call.1} parent=5 // pred_region
      %s386 = ssub.s32 %s22, 1
      // Predicated region
      $region13: #{tpu_custom_call.1} parent=11 // pred_check
        %p387 = pneg %p43
      $region14: #{tpu_custom_call.1} parent=11 // pred_check_branch
        %389 = sbr.rel (%p387) target = $region16
      $region15: #{tpu_custom_call.1} parent=11 // pred_region
        _
      $region16: #{tpu_custom_call.1} parent=11 // pred_fallthru
        _
      // Predicated region
      $region17: #{tpu_custom_call.1} parent=11 // pred_check
        %p390 = pneg %p64
      $region18: #{tpu_custom_call.1} parent=11 // pred_check_branch
        %392 = sbr.rel (%p390) target = $region20
      $region19: #{tpu_custom_call.1} parent=11 // pred_region
        _
      $region20: #{tpu_custom_call.1} parent=11 // pred_fallthru
        _
      // Predicated region
      $region21: #{tpu_custom_call.1} parent=11 // pred_check
        %p393 = pneg %p85
      $region22: #{tpu_custom_call.1} parent=11 // pred_check_branch
        %395 = sbr.rel (%p393) target = $region24
      $region23: #{tpu_custom_call.1} parent=11 // pred_region
        _
      $region24: #{tpu_custom_call.1} parent=11 // pred_fallthru
        _
      // Predicated region
      $region25: #{tpu_custom_call.1} parent=11 // pred_check
        %p396 = pneg %p106
      $region26: #{tpu_custom_call.1} parent=11 // pred_check_branch
        %398 = sbr.rel (%p396) target = $region28
      $region27: #{tpu_custom_call.1} parent=11 // pred_region
        _
      $region28: #{tpu_custom_call.1} parent=11 // pred_fallthru
        _
      // Predicated region
      $region29: #{tpu_custom_call.1} parent=11 // pred_check
        %p399 = pneg %p309
      $region30: #{tpu_custom_call.1} parent=11 // pred_check_branch
        %401 = sbr.rel (%p399) target = $region32
      $region31: #{tpu_custom_call.1} parent=11 // pred_region
        _
      $region32: #{tpu_custom_call.1} parent=11 // pred_fallthru
        _
      // Predicated region
      $region33: #{tpu_custom_call.1} parent=11 // pred_check
        %p402 = pneg %p330
      $region34: #{tpu_custom_call.1} parent=11 // pred_check_branch
        %404 = sbr.rel (%p402) target = $region36
      $region35: #{tpu_custom_call.1} parent=11 // pred_region
        _
      $region36: #{tpu_custom_call.1} parent=11 // pred_fallthru
        _
      // Predicated region
      $region37: #{tpu_custom_call.1} parent=11 // pred_check
        %p405 = pneg %p351
      $region38: #{tpu_custom_call.1} parent=11 // pred_check_branch
        %407 = sbr.rel (%p405) target = $region40
      $region39: #{tpu_custom_call.1} parent=11 // pred_region
        _
      $region40: #{tpu_custom_call.1} parent=11 // pred_fallthru
        _
    $region12: #{tpu_custom_call.1} parent=5 // pred_fallthru
      _
    %p408 = scmp.lt.s32.totalorder %s22, 2
    // Predicated region
    $region41: #{tpu_custom_call.1} parent=5 // pred_check
      %p409 = pneg %p408
    $region42: #{tpu_custom_call.1} parent=5 // pred_check_branch
      %411 = sbr.rel (%p409) target = $region44
    $region43: #{tpu_custom_call.1} parent=5 // pred_region
      // Predicated region
      $region45: #{tpu_custom_call.1} parent=43 // pred_check
        %p412 = pneg %p126
      $region46: #{tpu_custom_call.1} parent=43 // pred_check_branch
        %414 = sbr.rel (%p412) target = $region48
      $region47: #{tpu_custom_call.1} parent=43 // pred_region
        %p415 = scmp.lt.s32.totalorder %s22, 1
        %s416 = scalar_select %p415, %s22, 1
        %s417 = smul.addr %s416, 4
        %s418 = smul.addr %s417, 8
        %s419 = scalar_lea.vmem %s4, %s418
      $region48: #{tpu_custom_call.1} parent=43 // pred_fallthru
        _
      // Predicated region
      $region49: #{tpu_custom_call.1} parent=43 // pred_check
        %p420 = pneg %p152
      $region50: #{tpu_custom_call.1} parent=43 // pred_check_branch
        %422 = sbr.rel (%p420) target = $region52
      $region51: #{tpu_custom_call.1} parent=43 // pred_region
        %p423 = scmp.lt.s32.totalorder %s22, 1
        %s424 = scalar_select %p423, %s22, 1
        %s425 = scalar_lea.vmem %s5, %s424
      $region52: #{tpu_custom_call.1} parent=43 // pred_fallthru
        _
      // Predicated region
      $region53: #{tpu_custom_call.1} parent=43 // pred_check
        %p426 = pneg %p178
      $region54: #{tpu_custom_call.1} parent=43 // pred_check_branch
        %428 = sbr.rel (%p426) target = $region56
      $region55: #{tpu_custom_call.1} parent=43 // pred_region
        %p429 = scmp.lt.s32.totalorder %s22, 1
        %s430 = scalar_select %p429, %s22, 1
        %s431 = smul.addr %s430, 4
        %s432 = smul.addr %s431, 8
        %s433 = scalar_lea.vmem %s6, %s432
      $region56: #{tpu_custom_call.1} parent=43 // pred_fallthru
        _
      // Predicated region
      $region57: #{tpu_custom_call.1} parent=43 // pred_check
        %p434 = pneg %p204
      $region58: #{tpu_custom_call.1} parent=43 // pred_check_branch
        %436 = sbr.rel (%p434) target = $region60
      $region59: #{tpu_custom_call.1} parent=43 // pred_region
        %p437 = scmp.lt.s32.totalorder %s22, 1
        %s438 = scalar_select %p437, %s22, 1
        %s439 = smul.addr %s438, 4
        %s440 = smul.addr %s439, 8
        %s441 = scalar_lea.vmem %s7, %s440
      $region60: #{tpu_custom_call.1} parent=43 // pred_fallthru
        _
      // Predicated region
      $region61: #{tpu_custom_call.1} parent=43 // pred_check
        %p442 = pneg %p230
      $region62: #{tpu_custom_call.1} parent=43 // pred_check_branch
        %444 = sbr.rel (%p442) target = $region64
      $region63: #{tpu_custom_call.1} parent=43 // pred_region
        %p445 = scmp.lt.s32.totalorder %s22, 1
        %s446 = scalar_select %p445, %s22, 1
        %s447 = scalar_lea.vmem %s8, %s446
      $region64: #{tpu_custom_call.1} parent=43 // pred_fallthru
        _
      // Predicated region
      $region65: #{tpu_custom_call.1} parent=43 // pred_check
        %p448 = pneg %p256
      $region66: #{tpu_custom_call.1} parent=43 // pred_check_branch
        %450 = sbr.rel (%p448) target = $region68
      $region67: #{tpu_custom_call.1} parent=43 // pred_region
        %p451 = scmp.lt.s32.totalorder %s22, 1
        %s452 = scalar_select %p451, %s22, 1
        %s453 = smul.addr %s452, 16
        %s454 = smul.addr %s453, 8
        %s455 = scalar_lea.vmem %s9, %s454
      $region68: #{tpu_custom_call.1} parent=43 // pred_fallthru
        _
      // Predicated region
      $region69: #{tpu_custom_call.1} parent=43 // pred_check
        %p456 = pneg %p282
      $region70: #{tpu_custom_call.1} parent=43 // pred_check_branch
        %458 = sbr.rel (%p456) target = $region72
      $region71: #{tpu_custom_call.1} parent=43 // pred_region
        %p459 = scmp.lt.s32.totalorder %s22, 1
        %s460 = scalar_select %p459, %s22, 1
        %s461 = smul.addr %s460, 8
        %s462 = scalar_lea.vmem %s10, %s461
      $region72: #{tpu_custom_call.1} parent=43 // pred_fallthru
        _
    $region44: #{tpu_custom_call.1} parent=5 // pred_fallthru
      _
    %p463 = scmp.le.s32.totalorder 1, %s22
    %p464 = scmp.lt.s32.totalorder %s22, 3
    %p465 = pnand %p463, %p464
    %p466 = pneg %p465
    // Predicated region
    $region73: #{tpu_custom_call.1} parent=5 // pred_check
      _
    $region74: #{tpu_custom_call.1} parent=5 // pred_check_branch
      %468 = sbr.rel (%p465) target = $region76
    $region75: #{tpu_custom_call.1} parent=5 // pred_region
      %s469 = ssub.s32 %s22, 1
      %p470 = pneg %p43
      %p471 = pneg %p40
      %p472 = pneg %p64
      %p473 = pneg %p61
      %p474 = pneg %p85
      %p475 = pneg %p82
      %p476 = pneg %p106
      %p477 = pneg %p103
      %p478 = scmp.lt.s32.totalorder %s27, 1
      %s479 = scalar_select %p478, %s27, 1
      %s480 = smul.addr %s479, 4
      %s481 = smul.addr %s480, 8
      %s482 = scalar_lea.vmem %s4, %s481
      %p483 = pneg %p132
      %p484 = pneg %p129
      %p485 = scmp.lt.s32.totalorder %s27, 1
      %s486 = scalar_select %p485, %s27, 1
      %s487 = scalar_lea.vmem %s5, %s486
      %p488 = pneg %p158
      %p489 = pneg %p155
      %p490 = scmp.lt.s32.totalorder %s27, 1
      %s491 = scalar_select %p490, %s27, 1
      %s492 = smul.addr %s491, 4
      %s493 = smul.addr %s492, 8
      %s494 = scalar_lea.vmem %s6, %s493
      %p495 = pneg %p184
      %p496 = pneg %p181
      %p497 = scmp.lt.s32.totalorder %s27, 1
      %s498 = scalar_select %p497, %s27, 1
      %s499 = smul.addr %s498, 4
      %s500 = smul.addr %s499, 8
      %s501 = scalar_lea.vmem %s7, %s500
      %p502 = pneg %p210
      %p503 = pneg %p207
      %p504 = scmp.lt.s32.totalorder %s27, 1
      %s505 = scalar_select %p504, %s27, 1
      %s506 = scalar_lea.vmem %s8, %s505
      %p507 = pneg %p236
      %p508 = pneg %p233
      %p509 = scmp.lt.s32.totalorder %s27, 1
      %s510 = scalar_select %p509, %s27, 1
      %s511 = smul.addr %s510, 16
      %s512 = smul.addr %s511, 8
      %s513 = scalar_lea.vmem %s9, %s512
      %p514 = pneg %p262
      %p515 = pneg %p259
      %p516 = scmp.lt.s32.totalorder %s27, 1
      %s517 = scalar_select %p516, %s27, 1
      %s518 = smul.addr %s517, 8
      %s519 = scalar_lea.vmem %s10, %s518
      %p520 = pneg %p288
      %p521 = pneg %p285
      %p522 = pneg %p309
      %p523 = pneg %p306
      %p524 = pneg %p330
      %p525 = pneg %p327
      %p526 = pneg %p351
      %p527 = pneg %p348
      %p528 = pneg %p372
      %p529 = pneg %p369
      %p530 = scmp.lt.s32.totalorder %s27, 1
      %s531 = scalar_select %p530, %s27, 1
      %s532 = smul.addr %s531, 4
      %s533 = smul.addr %s532, 8
      %s534 = scalar_lea.vmem %s4, %s533
      %p535 = scmp.lt.s32.totalorder %s27, 1
      %s536 = scalar_select %p535, %s27, 1
      %s537 = scalar_lea.vmem %s5, %s536
      %p538 = scmp.lt.s32.totalorder %s27, 1
      %s539 = scalar_select %p538, %s27, 1
      %s540 = smul.addr %s539, 4
      %s541 = smul.addr %s540, 8
      %s542 = scalar_lea.vmem %s6, %s541
      %p543 = scmp.lt.s32.totalorder %s27, 1
      %s544 = scalar_select %p543, %s27, 1
      %s545 = smul.addr %s544, 4
      %s546 = smul.addr %s545, 8
      %s547 = scalar_lea.vmem %s7, %s546
      %p548 = scmp.lt.s32.totalorder %s27, 1
      %s549 = scalar_select %p548, %s27, 1
      %s550 = scalar_lea.vmem %s8, %s549
      %p551 = scmp.lt.s32.totalorder %s27, 1
      %s552 = scalar_select %p551, %s27, 1
      %s553 = smul.addr %s552, 16
      %s554 = smul.addr %s553, 8
      %s555 = scalar_lea.vmem %s9, %s554
      %p556 = scmp.lt.s32.totalorder %s27, 1
      %s557 = scalar_select %p556, %s27, 1
      %s558 = smul.addr %s557, 8
      %s559 = scalar_lea.vmem %s10, %s558
      %p560 = scmp.eq.s32.totalorder %s27, 0
      // Predicated region
      $region77: #{tpu_custom_call.1} parent=75 // pred_check
        %p561 = pneg %p560
      $region78: #{tpu_custom_call.1} parent=75 // pred_check_branch
        %563 = sbr.rel (%p561) target = $region80
      $region79: #{tpu_custom_call.1} parent=75 // pred_region
        %v564 = vld [vmem:[%s0] sm:$0xff]
        %v565 = vld [vmem:[%s0 + $0x8] sm:$0xff]
        %v566 = vld [vmem:[%s3] sm:$0x1]
        %v567 = vld [vmem:[%s3 + $0x1] sm:$0x1]
        %vm568 = vcmask 261120
        %v569 = vsel %vm568, %v564, 0.0
        %570 = vadd.xlane.f32.xlu0 %v569
        %v571 = vpop.xlane.xlu0 %570
        %v572 = vsel %vm568, %v565, 0.0
        %573 = vadd.xlane.f32.xlu0 %v572
        %v574 = vpop.xlane.xlu0 %573
        %v575 = vrcp.pop 32.0
        %v576 = vmul.f32 32.0, %v575
        %v577 = vsub.f32 1.0, %v576
        %v578 = vmul.f32 %v575, %v577
        %v579 = vadd.f32 %v575, %v578
        %vm580 = vweird.f32 %v575
        %v581 = vsel %vm580, %v575, %v579
        %v582 = vmul.f32 %v571, %v581
        %v583 = vmul.f32 %v574, %v581
        %v584 = vsub.f32 %v564, %v582
        %v585 = vsub.f32 %v565, %v583
        %v586 = vmul.f32 %v584, %v584
        %v587 = vmul.f32 %v585, %v585
        %v588 = vsel %vm568, %v586, 0.0
        %589 = vadd.xlane.f32.xlu0 %v588
        %v590 = vpop.xlane.xlu0 %589
        %v591 = vsel %vm568, %v587, 0.0
        %592 = vadd.xlane.f32.xlu0 %v591
        %v593 = vpop.xlane.xlu0 %592
        %v594 = vmul.f32 %v590, %v581
        %v595 = vmul.f32 %v593, %v581
        %v596 = vadd.f32 %v594, 1e-05
        %v597 = vadd.f32 %v595, 1e-05
        %v598 = vrsqrt.pop %v596
        %v599 = vmul.f32 %v598, %v596
        %v600 = vmul.f32 %v599, %v598
        %v601 = vmul.f32 0.5, %v600
        %v602 = vsub.f32 1.5, %v601
        %v603 = vmul.f32 %v598, %v602
        %vm604 = vweird.f32 %v596
        %vm605 = vweird.f32 %v598
        %vm606 = vmor %vm604, %vm605
        %v607 = vsel %vm606, %v598, %v603
        %v608 = vrsqrt.pop %v597
        %v609 = vmul.f32 %v608, %v597
        %v610 = vmul.f32 %v609, %v608
        %v611 = vmul.f32 0.5, %v610
        %v612 = vsub.f32 1.5, %v611
        %v613 = vmul.f32 %v608, %v612
        %vm614 = vweird.f32 %v597
        %vm615 = vweird.f32 %v608
        %vm616 = vmor %vm614, %vm615
        %v617 = vsel %vm616, %v608, %v613
        %v618 = vmul.f32 %v584, %v607
        %v619 = vmul.f32 %v585, %v617
        %v620 = vperm.slane %v566, 0
        %v621 = vmul.f32 %v618, %v620
        %v622 = vmul.f32 %v619, %v620
        %v623 = vperm.slane %v567, 0
        %v624 = vadd.f32 %v621, %v623
        %v625 = vadd.f32 %v622, %v623
        %626 = vst.msk [vmem:[#allocation2] sm:$0xff] %vm568, %v624
        %627 = vst.msk [vmem:[#allocation2 + $0x8] sm:$0xff] %vm568, %v625
      $region80: #{tpu_custom_call.1} parent=75 // pred_fallthru
        _
      %v628 = vld [vmem:[#allocation2] sm:$0xff]
      %v629 = vld [vmem:[#allocation2 + $0x8] sm:$0xff]
      %v630 = vld [vmem:[%s534] sm:$0xff]
      %v631 = vld [vmem:[%s534 + $0x8] sm:$0xff]
      %v632 = vld [vmem:[%s534 + $0x10] sm:$0xff]
      %v633 = vld [vmem:[%s534 + $0x18] sm:$0xff]
      %v634 = vld [vmem:[%s537] sm:$0x1]
      %v636 = vperm.slane %v634, 0
      %vm638 = vcmask 261120
      %v640 = vsel %vm638, %v628, 0
      %v643 = vsel %vm638, %v629, 0
      %645 = vmatpush.msra.mxu0 0.0
      %646 = vmatpush.msra.mxu0 0.0
      %647 = vmatpush.msra.mxu0 0.0
      %648 = vmatpush.msra.mxu0 0.0
      %649 = vmatpush.msra.mxu0 0.0
      %650 = vmatpush.msra.mxu0 0.0
      %651 = vmatpush.msra.mxu0 0.0
      %652 = vmatpush.msra.mxu0 0.0
      %653 = vmatpush.msra.mxu0 0.0
      %654 = vmatpush.msra.mxu0 0.0
      %655 = vmatpush.msra.mxu0 0.0
      %656 = vmatpush.msra.mxu0 0.0
      %657 = vmatpush.msra.mxu0 %v633
      %658 = vmatpush.msra.mxu0 %v632
      %659 = vmatpush.msra.mxu0 %v631
      %660 = vmatpush.msra.mxu0 %v630
      %661 = vmatmul.f32.gmra.mxu0 %v640
      %v662 = vpop.f32.mrf.mxu0
      %v663 = vadd.f32 %v636, %v662
      %664 = vmatmul.f32.gmra.mxu0 %v643
      %v665 = vpop.f32.mrf.mxu0
      %v666 = vadd.f32 %v636, %v665
      %667 = vdwg.mxu0
      %v668 = vld [vmem:[%s1] sm:$0x3]
      %v669 = vsub.f32 1.0, %v668
      %v671 = vrot.slane %v669, 1
      %v673 = vmul.f32 %v669, -1e+09
      %v674 = vmul.f32 %v671, -1e+09
      %v677 = vperm.slane %v673, 0
      %v678 = vperm.slane %v674, 0
      %682 = vrot.lane.b32.xlu0 %v663, 96
      %v683 = vpop.permute.xlu0 %682
      %vm684 = vcmask 64512
      %v685 = vsel %vm684, %v663, 0
      %v687 = vsel %vm684, %v683, 0
      %689 = vmatpush.xpose.msra.mxu0 0.0
      %690 = vmatpush.xpose.msra.mxu0 0.0
      %691 = vmatpush.xpose.msra.mxu0 0.0
      %692 = vmatpush.xpose.msra.mxu0 0.0
      %693 = vmatpush.xpose.msra.mxu0 0.0
      %694 = vmatpush.xpose.msra.mxu0 0.0
      %695 = vmatpush.xpose.msra.mxu0 0.0
      %696 = vmatpush.xpose.msra.mxu0 0.0
      %697 = vmatpush.xpose.msra.mxu0 0.0
      %698 = vmatpush.xpose.msra.mxu0 0.0
      %699 = vmatpush.xpose.msra.mxu0 0.0
      %700 = vmatpush.xpose.msra.mxu0 0.0
      %701 = vmatpush.xpose.msra.mxu0 0.0
      %702 = vmatpush.xpose.msra.mxu0 0.0
      %703 = vmatpush.xpose.msra.mxu0 0.0
      %704 = vmatpush.xpose.msra.mxu0 %v687
      %705 = vmatmul.f32.gmra.mxu0 %v685
      %v706 = vpop.f32.mrf.mxu0
      %v707 = vadd.f32 %v677, %v706
      %708 = vdwg.mxu0
      %710 = vrot.lane.b32.xlu0 %v666, 96
      %v711 = vpop.permute.xlu0 %710
      %v712 = vsel %vm684, %v666, 0
      %v714 = vsel %vm684, %v711, 0
      %716 = vmatpush.xpose.msra.mxu0 0.0
      %717 = vmatpush.xpose.msra.mxu0 0.0
      %718 = vmatpush.xpose.msra.mxu0 0.0
      %719 = vmatpush.xpose.msra.mxu0 0.0
      %720 = vmatpush.xpose.msra.mxu0 0.0
      %721 = vmatpush.xpose.msra.mxu0 0.0
      %722 = vmatpush.xpose.msra.mxu0 0.0
      %723 = vmatpush.xpose.msra.mxu0 0.0
      %724 = vmatpush.xpose.msra.mxu0 0.0
      %725 = vmatpush.xpose.msra.mxu0 0.0
      %726 = vmatpush.xpose.msra.mxu0 0.0
      %727 = vmatpush.xpose.msra.mxu0 0.0
      %728 = vmatpush.xpose.msra.mxu0 0.0
      %729 = vmatpush.xpose.msra.mxu0 0.0
      %730 = vmatpush.xpose.msra.mxu0 0.0
      %731 = vmatpush.xpose.msra.mxu0 %v714
      %732 = vmatmul.f32.gmra.mxu0 %v712
      %v733 = vpop.f32.mrf.mxu0
      %v734 = vadd.f32 %v678, %v733
      %735 = vdwg.mxu0
      %v736 = vsel %vm684, %v707, -inf
      %737 = vmax.xlane.f32.xlu0 %v736
      %v738 = vpop.xlane.xlu0 %737
      %v739 = vsel %vm684, %v734, -inf
      %740 = vmax.xlane.f32.xlu0 %v739
      %v741 = vpop.xlane.xlu0 %740
      %v742 = vsub.f32 %v707, %v738
      %v743 = vsub.f32 %v734, %v741
      %v744 = vmul.f32 %v742, 1.442695
      %v745 = vpow.pop %v744
      %v746 = vmul.f32 %v743, 1.442695
      %v747 = vpow.pop %v746
      %v748 = vsel %vm684, %v745, 0.0
      %749 = vadd.xlane.f32.xlu0 %v748
      %v750 = vpop.xlane.xlu0 %749
      %v751 = vsel %vm684, %v747, 0.0
      %752 = vadd.xlane.f32.xlu0 %v751
      %v753 = vpop.xlane.xlu0 %752
      %v754 = vrcp.pop %v750
      %v755 = vrcp.pop %v753
      %v756 = vmul.f32 %v745, %v754
      %v757 = vmul.f32 %v747, %v755
      %758 = vrot.lane.b32.xlu0 %v663, 64
      %v759 = vpop.permute.xlu0 %758
      %v762 = vsel %vm684, %v756, 0
      %764 = vmatpush.msra.mxu0 0.0
      %765 = vmatpush.msra.mxu0 0.0
      %766 = vmatpush.msra.mxu0 0.0
      %767 = vmatpush.msra.mxu0 0.0
      %768 = vmatpush.msra.mxu0 0.0
      %769 = vmatpush.msra.mxu0 0.0
      %770 = vmatpush.msra.mxu0 0.0
      %771 = vmatpush.msra.mxu0 0.0
      %772 = vmatpush.msra.mxu0 0.0
      %773 = vmatpush.msra.mxu0 0.0
      %774 = vmatpush.msra.mxu0 0.0
      %775 = vmatpush.msra.mxu0 0.0
      %776 = vmatpush.msra.mxu0 0.0
      %777 = vmatpush.msra.mxu0 0.0
      %778 = vmatpush.msra.mxu0 0.0
      %779 = vmatpush.msra.mxu0 %v759
      %780 = vmatmul.f32.gmra.mxu0 %v762
      %v781 = vpop.f32.mrf.mxu0
      %v782 = vadd.f32 0.0, %v781
      %783 = vdwg.mxu0
      %784 = vrot.lane.b32.xlu0 %v666, 64
      %v785 = vpop.permute.xlu0 %784
      %v788 = vsel %vm684, %v757, 0
      %790 = vmatpush.msra.mxu0 0.0
      %791 = vmatpush.msra.mxu0 0.0
      %792 = vmatpush.msra.mxu0 0.0
      %793 = vmatpush.msra.mxu0 0.0
      %794 = vmatpush.msra.mxu0 0.0
      %795 = vmatpush.msra.mxu0 0.0
      %796 = vmatpush.msra.mxu0 0.0
      %797 = vmatpush.msra.mxu0 0.0
      %798 = vmatpush.msra.mxu0 0.0
      %799 = vmatpush.msra.mxu0 0.0
      %800 = vmatpush.msra.mxu0 0.0
      %801 = vmatpush.msra.mxu0 0.0
      %802 = vmatpush.msra.mxu0 0.0
      %803 = vmatpush.msra.mxu0 0.0
      %804 = vmatpush.msra.mxu0 0.0
      %805 = vmatpush.msra.mxu0 %v785
      %806 = vmatmul.f32.gmra.mxu0 %v788
      %v807 = vpop.f32.mrf.mxu0
      %v808 = vadd.f32 0.0, %v807
      %809 = vdwg.mxu0
      %810 = vrot.lane.b32.xlu0 %v663, 120
      %v811 = vpop.permute.xlu0 %810
      %812 = vrot.lane.b32.xlu0 %v663, 88
      %v813 = vpop.permute.xlu0 %812
      %v814 = vsel %vm684, %v811, 0
      %v816 = vsel %vm684, %v813, 0
      %818 = vmatpush.xpose.msra.mxu0 0.0
      %819 = vmatpush.xpose.msra.mxu0 0.0
      %820 = vmatpush.xpose.msra.mxu0 0.0
      %821 = vmatpush.xpose.msra.mxu0 0.0
      %822 = vmatpush.xpose.msra.mxu0 0.0
      %823 = vmatpush.xpose.msra.mxu0 0.0
      %824 = vmatpush.xpose.msra.mxu0 0.0
      %825 = vmatpush.xpose.msra.mxu0 0.0
      %826 = vmatpush.xpose.msra.mxu0 0.0
      %827 = vmatpush.xpose.msra.mxu0 0.0
      %828 = vmatpush.xpose.msra.mxu0 0.0
      %829 = vmatpush.xpose.msra.mxu0 0.0
      %830 = vmatpush.xpose.msra.mxu0 0.0
      %831 = vmatpush.xpose.msra.mxu0 0.0
      %832 = vmatpush.xpose.msra.mxu0 0.0
      %833 = vmatpush.xpose.msra.mxu0 %v816
      %834 = vmatmul.f32.gmra.mxu0 %v814
      %v835 = vpop.f32.mrf.mxu0
      %v836 = vadd.f32 %v677, %v835
      %837 = vdwg.mxu0
      %838 = vrot.lane.b32.xlu0 %v666, 120
      %v839 = vpop.permute.xlu0 %838
      %840 = vrot.lane.b32.xlu0 %v666, 88
      %v841 = vpop.permute.xlu0 %840
      %v842 = vsel %vm684, %v839, 0
      %v844 = vsel %vm684, %v841, 0
      %846 = vmatpush.xpose.msra.mxu0 0.0
      %847 = vmatpush.xpose.msra.mxu0 0.0
      %848 = vmatpush.xpose.msra.mxu0 0.0
      %849 = vmatpush.xpose.msra.mxu0 0.0
      %850 = vmatpush.xpose.msra.mxu0 0.0
      %851 = vmatpush.xpose.msra.mxu0 0.0
      %852 = vmatpush.xpose.msra.mxu0 0.0
      %853 = vmatpush.xpose.msra.mxu0 0.0
      %854 = vmatpush.xpose.msra.mxu0 0.0
      %855 = vmatpush.xpose.msra.mxu0 0.0
      %856 = vmatpush.xpose.msra.mxu0 0.0
      %857 = vmatpush.xpose.msra.mxu0 0.0
      %858 = vmatpush.xpose.msra.mxu0 0.0
      %859 = vmatpush.xpose.msra.mxu0 0.0
      %860 = vmatpush.xpose.msra.mxu0 0.0
      %861 = vmatpush.xpose.msra.mxu0 %v844
      %862 = vmatmul.f32.gmra.mxu0 %v842
      %v863 = vpop.f32.mrf.mxu0
      %v864 = vadd.f32 %v678, %v863
      %865 = vdwg.mxu0
      %v866 = vsel %vm684, %v836, -inf
      %867 = vmax.xlane.f32.xlu0 %v866
      %v868 = vpop.xlane.xlu0 %867
      %v869 = vsel %vm684, %v864, -inf
      %870 = vmax.xlane.f32.xlu0 %v869
      %v871 = vpop.xlane.xlu0 %870
      %v872 = vsub.f32 %v836, %v868
      %v873 = vsub.f32 %v864, %v871
      %v874 = vmul.f32 %v872, 1.442695
      %v875 = vpow.pop %v874
      %v876 = vmul.f32 %v873, 1.442695
      %v877 = vpow.pop %v876
      %v878 = vsel %vm684, %v875, 0.0
      %879 = vadd.xlane.f32.xlu0 %v878
      %v880 = vpop.xlane.xlu0 %879
      %v881 = vsel %vm684, %v877, 0.0
      %882 = vadd.xlane.f32.xlu0 %v881
      %v883 = vpop.xlane.xlu0 %882
      %v884 = vrcp.pop %v880
      %v885 = vrcp.pop %v883
      %v886 = vmul.f32 %v875, %v884
      %v887 = vmul.f32 %v877, %v885
      %888 = vrot.lane.b32.xlu0 %v663, 56
      %v889 = vpop.permute.xlu0 %888
      %v892 = vsel %vm684, %v886, 0
      %894 = vmatpush.msra.mxu0 0.0
      %895 = vmatpush.msra.mxu0 0.0
      %896 = vmatpush.msra.mxu0 0.0
      %897 = vmatpush.msra.mxu0 0.0
      %898 = vmatpush.msra.mxu0 0.0
      %899 = vmatpush.msra.mxu0 0.0
      %900 = vmatpush.msra.mxu0 0.0
      %901 = vmatpush.msra.mxu0 0.0
      %902 = vmatpush.msra.mxu0 0.0
      %903 = vmatpush.msra.mxu0 0.0
      %904 = vmatpush.msra.mxu0 0.0
      %905 = vmatpush.msra.mxu0 0.0
      %906 = vmatpush.msra.mxu0 0.0
      %907 = vmatpush.msra.mxu0 0.0
      %908 = vmatpush.msra.mxu0 0.0
      %909 = vmatpush.msra.mxu0 %v889
      %910 = vmatmul.f32.gmra.mxu0 %v892
      %v911 = vpop.f32.mrf.mxu0
      %v912 = vadd.f32 0.0, %v911
      %913 = vdwg.mxu0
      %914 = vrot.lane.b32.xlu0 %v666, 56
      %v915 = vpop.permute.xlu0 %914
      %v918 = vsel %vm684, %v887, 0
      %920 = vmatpush.msra.mxu0 0.0
      %921 = vmatpush.msra.mxu0 0.0
      %922 = vmatpush.msra.mxu0 0.0
      %923 = vmatpush.msra.mxu0 0.0
      %924 = vmatpush.msra.mxu0 0.0
      %925 = vmatpush.msra.mxu0 0.0
      %926 = vmatpush.msra.mxu0 0.0
      %927 = vmatpush.msra.mxu0 0.0
      %928 = vmatpush.msra.mxu0 0.0
      %929 = vmatpush.msra.mxu0 0.0
      %930 = vmatpush.msra.mxu0 0.0
      %931 = vmatpush.msra.mxu0 0.0
      %932 = vmatpush.msra.mxu0 0.0
      %933 = vmatpush.msra.mxu0 0.0
      %934 = vmatpush.msra.mxu0 0.0
      %935 = vmatpush.msra.mxu0 %v915
      %936 = vmatmul.f32.gmra.mxu0 %v918
      %v937 = vpop.f32.mrf.mxu0
      %v938 = vadd.f32 0.0, %v937
      %939 = vdwg.mxu0
      %940 = vrot.lane.b32.xlu0 %v663, 112
      %v941 = vpop.permute.xlu0 %940
      %942 = vrot.lane.b32.xlu0 %v663, 80
      %v943 = vpop.permute.xlu0 %942
      %v944 = vsel %vm684, %v941, 0
      %v946 = vsel %vm684, %v943, 0
      %948 = vmatpush.xpose.msra.mxu0 0.0
      %949 = vmatpush.xpose.msra.mxu0 0.0
      %950 = vmatpush.xpose.msra.mxu0 0.0
      %951 = vmatpush.xpose.msra.mxu0 0.0
      %952 = vmatpush.xpose.msra.mxu0 0.0
      %953 = vmatpush.xpose.msra.mxu0 0.0
      %954 = vmatpush.xpose.msra.mxu0 0.0
      %955 = vmatpush.xpose.msra.mxu0 0.0
      %956 = vmatpush.xpose.msra.mxu0 0.0
      %957 = vmatpush.xpose.msra.mxu0 0.0
      %958 = vmatpush.xpose.msra.mxu0 0.0
      %959 = vmatpush.xpose.msra.mxu0 0.0
      %960 = vmatpush.xpose.msra.mxu0 0.0
      %961 = vmatpush.xpose.msra.mxu0 0.0
      %962 = vmatpush.xpose.msra.mxu0 0.0
      %963 = vmatpush.xpose.msra.mxu0 %v946
      %964 = vmatmul.f32.gmra.mxu0 %v944
      %v965 = vpop.f32.mrf.mxu0
      %v966 = vadd.f32 %v677, %v965
      %967 = vdwg.mxu0
      %968 = vrot.lane.b32.xlu0 %v666, 112
      %v969 = vpop.permute.xlu0 %968
      %970 = vrot.lane.b32.xlu0 %v666, 80
      %v971 = vpop.permute.xlu0 %970
      %v972 = vsel %vm684, %v969, 0
      %v974 = vsel %vm684, %v971, 0
      %976 = vmatpush.xpose.msra.mxu0 0.0
      %977 = vmatpush.xpose.msra.mxu0 0.0
      %978 = vmatpush.xpose.msra.mxu0 0.0
      %979 = vmatpush.xpose.msra.mxu0 0.0
      %980 = vmatpush.xpose.msra.mxu0 0.0
      %981 = vmatpush.xpose.msra.mxu0 0.0
      %982 = vmatpush.xpose.msra.mxu0 0.0
      %983 = vmatpush.xpose.msra.mxu0 0.0
      %984 = vmatpush.xpose.msra.mxu0 0.0
      %985 = vmatpush.xpose.msra.mxu0 0.0
      %986 = vmatpush.xpose.msra.mxu0 0.0
      %987 = vmatpush.xpose.msra.mxu0 0.0
      %988 = vmatpush.xpose.msra.mxu0 0.0
      %989 = vmatpush.xpose.msra.mxu0 0.0
      %990 = vmatpush.xpose.msra.mxu0 0.0
      %991 = vmatpush.xpose.msra.mxu0 %v974
      %992 = vmatmul.f32.gmra.mxu0 %v972
      %v993 = vpop.f32.mrf.mxu0
      %v994 = vadd.f32 %v678, %v993
      %995 = vdwg.mxu0
      %v996 = vsel %vm684, %v966, -inf
      %997 = vmax.xlane.f32.xlu0 %v996
      %v998 = vpop.xlane.xlu0 %997
      %v999 = vsel %vm684, %v994, -inf
      %1000 = vmax.xlane.f32.xlu0 %v999
      %v1001 = vpop.xlane.xlu0 %1000
      %v1002 = vsub.f32 %v966, %v998
      %v1003 = vsub.f32 %v994, %v1001
      %v1004 = vmul.f32 %v1002, 1.442695
      %v1005 = vpow.pop %v1004
      %v1006 = vmul.f32 %v1003, 1.442695
      %v1007 = vpow.pop %v1006
      %v1008 = vsel %vm684, %v1005, 0.0
      %1009 = vadd.xlane.f32.xlu0 %v1008
      %v1010 = vpop.xlane.xlu0 %1009
      %v1011 = vsel %vm684, %v1007, 0.0
      %1012 = vadd.xlane.f32.xlu0 %v1011
      %v1013 = vpop.xlane.xlu0 %1012
      %v1014 = vrcp.pop %v1010
      %v1015 = vrcp.pop %v1013
      %v1016 = vmul.f32 %v1005, %v1014
      %v1017 = vmul.f32 %v1007, %v1015
      %1018 = vrot.lane.b32.xlu0 %v663, 48
      %v1019 = vpop.permute.xlu0 %1018
      %v1022 = vsel %vm684, %v1016, 0
      %1024 = vmatpush.msra.mxu0 0.0
      %1025 = vmatpush.msra.mxu0 0.0
      %1026 = vmatpush.msra.mxu0 0.0
      %1027 = vmatpush.msra.mxu0 0.0
      %1028 = vmatpush.msra.mxu0 0.0
      %1029 = vmatpush.msra.mxu0 0.0
      %1030 = vmatpush.msra.mxu0 0.0
      %1031 = vmatpush.msra.mxu0 0.0
      %1032 = vmatpush.msra.mxu0 0.0
      %1033 = vmatpush.msra.mxu0 0.0
      %1034 = vmatpush.msra.mxu0 0.0
      %1035 = vmatpush.msra.mxu0 0.0
      %1036 = vmatpush.msra.mxu0 0.0
      %1037 = vmatpush.msra.mxu0 0.0
      %1038 = vmatpush.msra.mxu0 0.0
      %1039 = vmatpush.msra.mxu0 %v1019
      %1040 = vmatmul.f32.gmra.mxu0 %v1022
      %v1041 = vpop.f32.mrf.mxu0
      %v1042 = vadd.f32 0.0, %v1041
      %1043 = vdwg.mxu0
      %1044 = vrot.lane.b32.xlu0 %v666, 48
      %v1045 = vpop.permute.xlu0 %1044
      %v1048 = vsel %vm684, %v1017, 0
      %1050 = vmatpush.msra.mxu0 0.0
      %1051 = vmatpush.msra.mxu0 0.0
      %1052 = vmatpush.msra.mxu0 0.0
      %1053 = vmatpush.msra.mxu0 0.0
      %1054 = vmatpush.msra.mxu0 0.0
      %1055 = vmatpush.msra.mxu0 0.0
      %1056 = vmatpush.msra.mxu0 0.0
      %1057 = vmatpush.msra.mxu0 0.0
      %1058 = vmatpush.msra.mxu0 0.0
      %1059 = vmatpush.msra.mxu0 0.0
      %1060 = vmatpush.msra.mxu0 0.0
      %1061 = vmatpush.msra.mxu0 0.0
      %1062 = vmatpush.msra.mxu0 0.0
      %1063 = vmatpush.msra.mxu0 0.0
      %1064 = vmatpush.msra.mxu0 0.0
      %1065 = vmatpush.msra.mxu0 %v1045
      %1066 = vmatmul.f32.gmra.mxu0 %v1048
      %v1067 = vpop.f32.mrf.mxu0
      %v1068 = vadd.f32 0.0, %v1067
      %1069 = vdwg.mxu0
      %1070 = vrot.lane.b32.xlu0 %v663, 104
      %v1071 = vpop.permute.xlu0 %1070
      %1072 = vrot.lane.b32.xlu0 %v663, 72
      %v1073 = vpop.permute.xlu0 %1072
      %v1074 = vsel %vm684, %v1071, 0
      %v1076 = vsel %vm684, %v1073, 0
      %1078 = vmatpush.xpose.msra.mxu0 0.0
      %1079 = vmatpush.xpose.msra.mxu0 0.0
      %1080 = vmatpush.xpose.msra.mxu0 0.0
      %1081 = vmatpush.xpose.msra.mxu0 0.0
      %1082 = vmatpush.xpose.msra.mxu0 0.0
      %1083 = vmatpush.xpose.msra.mxu0 0.0
      %1084 = vmatpush.xpose.msra.mxu0 0.0
      %1085 = vmatpush.xpose.msra.mxu0 0.0
      %1086 = vmatpush.xpose.msra.mxu0 0.0
      %1087 = vmatpush.xpose.msra.mxu0 0.0
      %1088 = vmatpush.xpose.msra.mxu0 0.0
      %1089 = vmatpush.xpose.msra.mxu0 0.0
      %1090 = vmatpush.xpose.msra.mxu0 0.0
      %1091 = vmatpush.xpose.msra.mxu0 0.0
      %1092 = vmatpush.xpose.msra.mxu0 0.0
      %1093 = vmatpush.xpose.msra.mxu0 %v1076
      %1094 = vmatmul.f32.gmra.mxu0 %v1074
      %v1095 = vpop.f32.mrf.mxu0
      %v1096 = vadd.f32 %v677, %v1095
      %1097 = vdwg.mxu0
      %1098 = vrot.lane.b32.xlu0 %v666, 104
      %v1099 = vpop.permute.xlu0 %1098
      %1100 = vrot.lane.b32.xlu0 %v666, 72
      %v1101 = vpop.permute.xlu0 %1100
      %v1102 = vsel %vm684, %v1099, 0
      %v1104 = vsel %vm684, %v1101, 0
      %1106 = vmatpush.xpose.msra.mxu0 0.0
      %1107 = vmatpush.xpose.msra.mxu0 0.0
      %1108 = vmatpush.xpose.msra.mxu0 0.0
      %1109 = vmatpush.xpose.msra.mxu0 0.0
      %1110 = vmatpush.xpose.msra.mxu0 0.0
      %1111 = vmatpush.xpose.msra.mxu0 0.0
      %1112 = vmatpush.xpose.msra.mxu0 0.0
      %1113 = vmatpush.xpose.msra.mxu0 0.0
      %1114 = vmatpush.xpose.msra.mxu0 0.0
      %1115 = vmatpush.xpose.msra.mxu0 0.0
      %1116 = vmatpush.xpose.msra.mxu0 0.0
      %1117 = vmatpush.xpose.msra.mxu0 0.0
      %1118 = vmatpush.xpose.msra.mxu0 0.0
      %1119 = vmatpush.xpose.msra.mxu0 0.0
      %1120 = vmatpush.xpose.msra.mxu0 0.0
      %1121 = vmatpush.xpose.msra.mxu0 %v1104
      %1122 = vmatmul.f32.gmra.mxu0 %v1102
      %v1123 = vpop.f32.mrf.mxu0
      %v1124 = vadd.f32 %v678, %v1123
      %1125 = vdwg.mxu0
      %v1126 = vsel %vm684, %v1096, -inf
      %1127 = vmax.xlane.f32.xlu0 %v1126
      %v1128 = vpop.xlane.xlu0 %1127
      %v1129 = vsel %vm684, %v1124, -inf
      %1130 = vmax.xlane.f32.xlu0 %v1129
      %v1131 = vpop.xlane.xlu0 %1130
      %v1132 = vsub.f32 %v1096, %v1128
      %v1133 = vsub.f32 %v1124, %v1131
      %v1134 = vmul.f32 %v1132, 1.442695
      %v1135 = vpow.pop %v1134
      %v1136 = vmul.f32 %v1133, 1.442695
      %v1137 = vpow.pop %v1136
      %v1138 = vsel %vm684, %v1135, 0.0
      %1139 = vadd.xlane.f32.xlu0 %v1138
      %v1140 = vpop.xlane.xlu0 %1139
      %v1141 = vsel %vm684, %v1137, 0.0
      %1142 = vadd.xlane.f32.xlu0 %v1141
      %v1143 = vpop.xlane.xlu0 %1142
      %v1144 = vrcp.pop %v1140
      %v1145 = vrcp.pop %v1143
      %v1146 = vmul.f32 %v1135, %v1144
      %v1147 = vmul.f32 %v1137, %v1145
      %1148 = vrot.lane.b32.xlu0 %v663, 40
      %v1149 = vpop.permute.xlu0 %1148
      %v1152 = vsel %vm684, %v1146, 0
      %1154 = vmatpush.msra.mxu0 0.0
      %1155 = vmatpush.msra.mxu0 0.0
      %1156 = vmatpush.msra.mxu0 0.0
      %1157 = vmatpush.msra.mxu0 0.0
      %1158 = vmatpush.msra.mxu0 0.0
      %1159 = vmatpush.msra.mxu0 0.0
      %1160 = vmatpush.msra.mxu0 0.0
      %1161 = vmatpush.msra.mxu0 0.0
      %1162 = vmatpush.msra.mxu0 0.0
      %1163 = vmatpush.msra.mxu0 0.0
      %1164 = vmatpush.msra.mxu0 0.0
      %1165 = vmatpush.msra.mxu0 0.0
      %1166 = vmatpush.msra.mxu0 0.0
      %1167 = vmatpush.msra.mxu0 0.0
      %1168 = vmatpush.msra.mxu0 0.0
      %1169 = vmatpush.msra.mxu0 %v1149
      %1170 = vmatmul.f32.gmra.mxu0 %v1152
      %v1171 = vpop.f32.mrf.mxu0
      %v1172 = vadd.f32 0.0, %v1171
      %1173 = vdwg.mxu0
      %1174 = vrot.lane.b32.xlu0 %v666, 40
      %v1175 = vpop.permute.xlu0 %1174
      %v1178 = vsel %vm684, %v1147, 0
      %1180 = vmatpush.msra.mxu0 0.0
      %1181 = vmatpush.msra.mxu0 0.0
      %1182 = vmatpush.msra.mxu0 0.0
      %1183 = vmatpush.msra.mxu0 0.0
      %1184 = vmatpush.msra.mxu0 0.0
      %1185 = vmatpush.msra.mxu0 0.0
      %1186 = vmatpush.msra.mxu0 0.0
      %1187 = vmatpush.msra.mxu0 0.0
      %1188 = vmatpush.msra.mxu0 0.0
      %1189 = vmatpush.msra.mxu0 0.0
      %1190 = vmatpush.msra.mxu0 0.0
      %1191 = vmatpush.msra.mxu0 0.0
      %1192 = vmatpush.msra.mxu0 0.0
      %1193 = vmatpush.msra.mxu0 0.0
      %1194 = vmatpush.msra.mxu0 0.0
      %1195 = vmatpush.msra.mxu0 %v1175
      %1196 = vmatmul.f32.gmra.mxu0 %v1178
      %v1197 = vpop.f32.mrf.mxu0
      %v1198 = vadd.f32 0.0, %v1197
      %1199 = vdwg.mxu0
      %1202 = vrot.lane.b32.xlu0 %v912, 8
      %v1203 = vpop.permute.xlu0 %1202
      %1204 = vrot.lane.b32.xlu0 %v938, 8
      %v1205 = vpop.permute.xlu0 %1204
      %1210 = vrot.lane.b32.xlu0 %v1042, 16
      %v1211 = vpop.permute.xlu0 %1210
      %1212 = vrot.lane.b32.xlu0 %v1068, 16
      %v1213 = vpop.permute.xlu0 %1212
      %1218 = vrot.lane.b32.xlu0 %v1172, 24
      %v1219 = vpop.permute.xlu0 %1218
      %1220 = vrot.lane.b32.xlu0 %v1198, 24
      %v1221 = vpop.permute.xlu0 %1220
      %v1224 = vsel %vm684, %v782, %v1203
      %v1225 = vsel %vm684, %v808, %v1205
      %vm1226 = vcmask 130048
      %v1227 = vsel %vm1226, %v1224, %v1211
      %v1228 = vsel %vm1226, %v1225, %v1213
      %vm1229 = vcmask 195584
      %v1230 = vsel %vm1229, %v1227, %v1219
      %v1231 = vsel %vm1229, %v1228, %v1221
      %v1232 = vld [vmem:[%s559] sm:$0x3f]
      %v1233 = vld [vmem:[%s542] sm:$0xff]
      %v1234 = vld [vmem:[%s542 + $0x8] sm:$0xff]
      %v1235 = vld [vmem:[%s542 + $0x10] sm:$0xff]
      %v1236 = vld [vmem:[%s542 + $0x18] sm:$0xff]
      %v1237 = vperm.slane %v1232, 0
      %v1239 = vsel %vm638, %v1230, 0
      %v1242 = vsel %vm638, %v1231, 0
      %1244 = vmatpush.msra.mxu0 0.0
      %1245 = vmatpush.msra.mxu0 0.0
      %1246 = vmatpush.msra.mxu0 0.0
      %1247 = vmatpush.msra.mxu0 0.0
      %1248 = vmatpush.msra.mxu0 0.0
      %1249 = vmatpush.msra.mxu0 0.0
      %1250 = vmatpush.msra.mxu0 0.0
      %1251 = vmatpush.msra.mxu0 0.0
      %1252 = vmatpush.msra.mxu0 0.0
      %1253 = vmatpush.msra.mxu0 0.0
      %1254 = vmatpush.msra.mxu0 0.0
      %1255 = vmatpush.msra.mxu0 0.0
      %1256 = vmatpush.msra.mxu0 %v1236
      %1257 = vmatpush.msra.mxu0 %v1235
      %1258 = vmatpush.msra.mxu0 %v1234
      %1259 = vmatpush.msra.mxu0 %v1233
      %1260 = vmatmul.f32.gmra.mxu0 %v1239
      %v1261 = vpop.f32.mrf.mxu0
      %v1262 = vadd.f32 %v1237, %v1261
      %1263 = vmatmul.f32.gmra.mxu0 %v1242
      %v1264 = vpop.f32.mrf.mxu0
      %v1265 = vadd.f32 %v1237, %v1264
      %1266 = vdwg.mxu0
      %v1267 = vadd.f32 %v628, %v1262
      %v1268 = vadd.f32 %v629, %v1265
      %v1269 = vsel %vm638, %v1267, 0.0
      %1270 = vadd.xlane.f32.xlu0 %v1269
      %v1271 = vpop.xlane.xlu0 %1270
      %v1272 = vsel %vm638, %v1268, 0.0
      %1273 = vadd.xlane.f32.xlu0 %v1272
      %v1274 = vpop.xlane.xlu0 %1273
      %v1275 = vrcp.pop 32.0
      %v1276 = vmul.f32 32.0, %v1275
      %v1277 = vsub.f32 1.0, %v1276
      %v1278 = vmul.f32 %v1275, %v1277
      %v1279 = vadd.f32 %v1275, %v1278
      %vm1280 = vweird.f32 %v1275
      %v1281 = vsel %vm1280, %v1275, %v1279
      %v1282 = vmul.f32 %v1271, %v1281
      %v1283 = vmul.f32 %v1274, %v1281
      %v1284 = vsub.f32 %v1267, %v1282
      %v1285 = vsub.f32 %v1268, %v1283
      %v1286 = vmul.f32 %v1284, %v1284
      %v1287 = vmul.f32 %v1285, %v1285
      %v1288 = vsel %vm638, %v1286, 0.0
      %1289 = vadd.xlane.f32.xlu0 %v1288
      %v1290 = vpop.xlane.xlu0 %1289
      %v1291 = vsel %vm638, %v1287, 0.0
      %1292 = vadd.xlane.f32.xlu0 %v1291
      %v1293 = vpop.xlane.xlu0 %1292
      %v1294 = vmul.f32 %v1290, %v1281
      %v1295 = vmul.f32 %v1293, %v1281
      %v1296 = vadd.f32 %v1294, 1e-05
      %v1297 = vadd.f32 %v1295, 1e-05
      %v1298 = vrsqrt.pop %v1296
      %v1299 = vmul.f32 %v1298, %v1296
      %v1300 = vmul.f32 %v1299, %v1298
      %v1301 = vmul.f32 0.5, %v1300
      %v1302 = vsub.f32 1.5, %v1301
      %v1303 = vmul.f32 %v1298, %v1302
      %vm1304 = vweird.f32 %v1296
      %vm1305 = vweird.f32 %v1298
      %vm1306 = vmor %vm1304, %vm1305
      %v1307 = vsel %vm1306, %v1298, %v1303
      %v1308 = vrsqrt.pop %v1297
      %v1309 = vmul.f32 %v1308, %v1297
      %v1310 = vmul.f32 %v1309, %v1308
      %v1311 = vmul.f32 0.5, %v1310
      %v1312 = vsub.f32 1.5, %v1311
      %v1313 = vmul.f32 %v1308, %v1312
      %vm1314 = vweird.f32 %v1297
      %vm1315 = vweird.f32 %v1308
      %vm1316 = vmor %vm1314, %vm1315
      %v1317 = vsel %vm1316, %v1308, %v1313
      %v1318 = vmul.f32 %v1284, %v1307
      %v1319 = vmul.f32 %v1285, %v1317
      %v1320 = vperm.slane %v1232, 1
      %v1321 = vmul.f32 %v1318, %v1320
      %v1322 = vmul.f32 %v1319, %v1320
      %v1323 = vperm.slane %v1232, 2
      %v1324 = vadd.f32 %v1321, %v1323
      %v1325 = vadd.f32 %v1322, %v1323
      %v1326 = vld [vmem:[%s547] sm:$0xff]
      %v1327 = vld [vmem:[%s547 + $0x8] sm:$0xff]
      %v1328 = vld [vmem:[%s547 + $0x10] sm:$0xff]
      %v1329 = vld [vmem:[%s547 + $0x18] sm:$0xff]
      %v1330 = vld [vmem:[%s550] sm:$0x1]
      %v1332 = vperm.slane %v1330, 0
      %v1335 = vsel %vm638, %v1324, 0
      %v1338 = vsel %vm638, %v1325, 0
      %1340 = vmatpush.msra.mxu0 0.0
      %1341 = vmatpush.msra.mxu0 0.0
      %1342 = vmatpush.msra.mxu0 0.0
      %1343 = vmatpush.msra.mxu0 0.0
      %1344 = vmatpush.msra.mxu0 0.0
      %1345 = vmatpush.msra.mxu0 0.0
      %1346 = vmatpush.msra.mxu0 0.0
      %1347 = vmatpush.msra.mxu0 0.0
      %1348 = vmatpush.msra.mxu0 0.0
      %1349 = vmatpush.msra.mxu0 0.0
      %1350 = vmatpush.msra.mxu0 0.0
      %1351 = vmatpush.msra.mxu0 0.0
      %1352 = vmatpush.msra.mxu0 %v1329
      %1353 = vmatpush.msra.mxu0 %v1328
      %1354 = vmatpush.msra.mxu0 %v1327
      %1355 = vmatpush.msra.mxu0 %v1326
      %1356 = vmatmul.f32.gmra.mxu0 %v1335
      %v1357 = vpop.f32.mrf.mxu0
      %v1358 = vadd.f32 %v1332, %v1357
      %1359 = vmatmul.f32.gmra.mxu0 %v1338
      %v1360 = vpop.f32.mrf.mxu0
      %v1361 = vadd.f32 %v1332, %v1360
      %1362 = vdwg.mxu0
      %v1363 = vmul.f32 %v1358, %v1358
      %v1364 = vmul.f32 %v1361, %v1361
      %v1365 = vmul.f32 %v1358, %v1363
      %v1366 = vmul.f32 %v1361, %v1364
      %v1367 = vmul.f32 %v1365, 0.044715
      %v1368 = vmul.f32 %v1366, 0.044715
      %v1369 = vadd.f32 %v1358, %v1367
      %v1370 = vadd.f32 %v1361, %v1368
      %v1371 = vmul.f32 %v1369, 0.7978846
      %v1372 = vmul.f32 %v1370, 0.7978846
      %v1373 = vtanh.pop %v1371
      %v1374 = vtanh.pop %v1372
      %v1375 = vadd.f32 %v1373, 1.0
      %v1376 = vadd.f32 %v1374, 1.0
      %v1377 = vmul.f32 %v1375, 0.5
      %v1378 = vmul.f32 %v1376, 0.5
      %v1379 = vmul.f32 %v1358, %v1377
      %v1380 = vmul.f32 %v1361, %v1378
      %v1381 = vld [vmem:[%s555] sm:$0xff]
      %v1382 = vld [vmem:[%s555 + $0x8] sm:$0xff]
      %v1383 = vld [vmem:[%s555 + $0x10] sm:$0xff]
      %v1384 = vld [vmem:[%s555 + $0x18] sm:$0xff]
      %v1385 = vld [vmem:[%s555 + $0x20] sm:$0xff]
      %v1386 = vld [vmem:[%s555 + $0x28] sm:$0xff]
      %v1387 = vld [vmem:[%s555 + $0x30] sm:$0xff]
      %v1388 = vld [vmem:[%s555 + $0x38] sm:$0xff]
      %v1389 = vld [vmem:[%s555 + $0x40] sm:$0xff]
      %v1390 = vld [vmem:[%s555 + $0x48] sm:$0xff]
      %v1391 = vld [vmem:[%s555 + $0x50] sm:$0xff]
      %v1392 = vld [vmem:[%s555 + $0x58] sm:$0xff]
      %v1393 = vld [vmem:[%s555 + $0x60] sm:$0xff]
      %v1394 = vld [vmem:[%s555 + $0x68] sm:$0xff]
      %v1395 = vld [vmem:[%s555 + $0x70] sm:$0xff]
      %v1396 = vld [vmem:[%s555 + $0x78] sm:$0xff]
      %v1397 = vperm.slane %v1232, 3
      %1398 = vmatpush.msra.mxu0 %v1396
      %1399 = vmatpush.msra.mxu0 %v1395
      %1400 = vmatpush.msra.mxu0 %v1394
      %1401 = vmatpush.msra.mxu0 %v1393
      %1402 = vmatpush.msra.mxu0 %v1392
      %1403 = vmatpush.msra.mxu0 %v1391
      %1404 = vmatpush.msra.mxu0 %v1390
      %1405 = vmatpush.msra.mxu0 %v1389
      %1406 = vmatpush.msra.mxu0 %v1388
      %1407 = vmatpush.msra.mxu0 %v1387
      %1408 = vmatpush.msra.mxu0 %v1386
      %1409 = vmatpush.msra.mxu0 %v1385
      %1410 = vmatpush.msra.mxu0 %v1384
      %1411 = vmatpush.msra.mxu0 %v1383
      %1412 = vmatpush.msra.mxu0 %v1382
      %1413 = vmatpush.msra.mxu0 %v1381
      %1414 = vmatmul.f32.gmra.mxu0 %v1379
      %v1415 = vpop.f32.mrf.mxu0
      %v1416 = vadd.f32 %v1397, %v1415
      %1417 = vmatmul.f32.gmra.mxu0 %v1380
      %v1418 = vpop.f32.mrf.mxu0
      %v1419 = vadd.f32 %v1397, %v1418
      %1420 = vdwg.mxu0
      %v1421 = vadd.f32 %v1324, %v1416
      %v1422 = vadd.f32 %v1325, %v1419
      %v1423 = vsel %vm638, %v1421, 0.0
      %1424 = vadd.xlane.f32.xlu0 %v1423
      %v1425 = vpop.xlane.xlu0 %1424
      %v1426 = vsel %vm638, %v1422, 0.0
      %1427 = vadd.xlane.f32.xlu0 %v1426
      %v1428 = vpop.xlane.xlu0 %1427
      %v1429 = vmul.f32 %v1425, %v1281
      %v1430 = vmul.f32 %v1428, %v1281
      %v1431 = vsub.f32 %v1421, %v1429
      %v1432 = vsub.f32 %v1422, %v1430
      %v1433 = vmul.f32 %v1431, %v1431
      %v1434 = vmul.f32 %v1432, %v1432
      %v1435 = vsel %vm638, %v1433, 0.0
      %1436 = vadd.xlane.f32.xlu0 %v1435
      %v1437 = vpop.xlane.xlu0 %1436
      %v1438 = vsel %vm638, %v1434, 0.0
      %1439 = vadd.xlane.f32.xlu0 %v1438
      %v1440 = vpop.xlane.xlu0 %1439
      %v1441 = vmul.f32 %v1437, %v1281
      %v1442 = vmul.f32 %v1440, %v1281
      %v1443 = vadd.f32 %v1441, 1e-05
      %v1444 = vadd.f32 %v1442, 1e-05
      %v1445 = vrsqrt.pop %v1443
      %v1446 = vmul.f32 %v1445, %v1443
      %v1447 = vmul.f32 %v1446, %v1445
      %v1448 = vmul.f32 0.5, %v1447
      %v1449 = vsub.f32 1.5, %v1448
      %v1450 = vmul.f32 %v1445, %v1449
      %vm1451 = vweird.f32 %v1443
      %vm1452 = vweird.f32 %v1445
      %vm1453 = vmor %vm1451, %vm1452
      %v1454 = vsel %vm1453, %v1445, %v1450
      %v1455 = vrsqrt.pop %v1444
      %v1456 = vmul.f32 %v1455, %v1444
      %v1457 = vmul.f32 %v1456, %v1455
      %v1458 = vmul.f32 0.5, %v1457
      %v1459 = vsub.f32 1.5, %v1458
      %v1460 = vmul.f32 %v1455, %v1459
      %vm1461 = vweird.f32 %v1444
      %vm1462 = vweird.f32 %v1455
      %vm1463 = vmor %vm1461, %vm1462
      %v1464 = vsel %vm1463, %v1455, %v1460
      %v1465 = vmul.f32 %v1431, %v1454
      %v1466 = vmul.f32 %v1432, %v1464
      %v1467 = vperm.slane %v1232, 4
      %v1468 = vmul.f32 %v1465, %v1467
      %v1469 = vmul.f32 %v1466, %v1467
      %v1470 = vperm.slane %v1232, 5
      %v1471 = vadd.f32 %v1468, %v1470
      %v1472 = vadd.f32 %v1469, %v1470
      %1473 = vst.msk [vmem:[#allocation2] sm:$0xff] %vm638, %v1471
      %1474 = vst.msk [vmem:[#allocation2 + $0x8] sm:$0xff] %vm638, %v1472
      %p1475 = scmp.eq.s32.totalorder %s27, 1
      // Predicated region
      $region81: #{tpu_custom_call.1} parent=75 // pred_check
        %p1476 = pneg %p1475
      $region82: #{tpu_custom_call.1} parent=75 // pred_check_branch
        %1478 = sbr.rel (%p1476) target = $region84
      $region83: #{tpu_custom_call.1} parent=75 // pred_region
        %v1479 = vld [vmem:[%s2] sm:$0x3]
        %v1480 = vperm.slane %v1479, 0
        %v1481 = vlaneseq
        %v1482 = vshrl.u32 %v1481, 7
        %1484 = vset.pattern.permute.xlu0 %v1482
        %1485 = vperm.xlu0 %1484, %v1480
        %v1486 = vpop.permute.xlu0 %1485
        %v1487 = vperm.slane %v1479, 1
        %v1488 = vlaneseq
        %v1489 = vshrl.u32 %v1488, 7
        %1491 = vset.pattern.permute.xlu0 %v1489
        %1492 = vperm.xlu0 %1491, %v1487
        %v1493 = vpop.permute.xlu0 %1492
        %v1494 = vmul.f32 %v1471, %v1486
        %v1495 = vmul.f32 %v1472, %v1493
        %v1496 = vsel %vm638, %v1494, 0.0
        %v1497 = vrot.slane %v1496, 4
        %v1498 = vadd.f32 %v1496, %v1497
        %v1499 = vrot.slane %v1498, 2
        %v1500 = vadd.f32 %v1498, %v1499
        %v1501 = vrot.slane %v1500, 1
        %v1502 = vadd.f32 %v1500, %v1501
        %v1503 = vsel %vm638, %v1495, 0.0
        %v1504 = vrot.slane %v1503, 4
        %v1505 = vadd.f32 %v1503, %v1504
        %v1506 = vrot.slane %v1505, 2
        %v1507 = vadd.f32 %v1505, %v1506
        %v1508 = vrot.slane %v1507, 1
        %v1509 = vadd.f32 %v1507, %v1508
        %vm1510 = vcmask 58368
        %v1511 = vsel %vm1510, %v1479, 0.0
        %1512 = vadd.xlane.f32.xlu0 %v1511
        %v1513 = vpop.xlane.xlu0 %1512
        %v1514 = vmax.f32 %v1513, 1.0
        %v1515 = vrcp.pop %v1514
        %v1517 = vrot.slane %v1515, 1
        %v1520 = vmul.f32 %v1502, %v1515
        %v1521 = vmul.f32 %v1509, %v1517
        %v1524 = vrot.slane %v1472, 7
        %vm1525 = vcmask 1041409
        %v1526 = vsel %vm1525, %v1524, %v1471
        %v1530 = vrot.slane %v1521, 7
        %v1531 = vsel %vm1525, %v1530, %v1520
        %1532 = vrot.lane.b32.xlu0 %v1531, 32
        %v1533 = vpop.permute.xlu0 %1532
        %v1535 = vsel %vm638, %v1526, %v1533
        %v1536 = vld [vmem:[%s11] sm:$0x1]
        %v1537 = vld [vmem:[%s11 + $0x1] sm:$0x1]
        %vm1538 = vcmask 517120
        %v1539 = vsel %vm1538, %v1535, 0.0
        %1540 = vadd.xlane.f32.xlu0 %v1539
        %v1541 = vpop.xlane.xlu0 %1540
        %v1542 = vrcp.pop 64.0
        %v1543 = vmul.f32 64.0, %v1542
        %v1544 = vsub.f32 1.0, %v1543
        %v1545 = vmul.f32 %v1542, %v1544
        %v1546 = vadd.f32 %v1542, %v1545
        %vm1547 = vweird.f32 %v1542
        %v1548 = vsel %vm1547, %v1542, %v1546
        %v1549 = vmul.f32 %v1541, %v1548
        %v1550 = vsub.f32 %v1535, %v1549
        %v1551 = vmul.f32 %v1550, %v1550
        %v1552 = vsel %vm1538, %v1551, 0.0
        %1553 = vadd.xlane.f32.xlu0 %v1552
        %v1554 = vpop.xlane.xlu0 %1553
        %v1555 = vmul.f32 %v1554, %v1548
        %v1556 = vadd.f32 %v1555, 1e-05
        %v1557 = vrsqrt.pop %v1556
        %v1558 = vmul.f32 %v1557, %v1556
        %v1559 = vmul.f32 %v1558, %v1557
        %v1560 = vmul.f32 0.5, %v1559
        %v1561 = vsub.f32 1.5, %v1560
        %v1562 = vmul.f32 %v1557, %v1561
        %vm1563 = vweird.f32 %v1556
        %vm1564 = vweird.f32 %v1557
        %vm1565 = vmor %vm1563, %vm1564
        %v1566 = vsel %vm1565, %v1557, %v1562
        %v1567 = vmul.f32 %v1550, %v1566
        %v1568 = vperm.slane %v1536, 0
        %v1569 = vmul.f32 %v1567, %v1568
        %v1570 = vperm.slane %v1537, 0
        %v1571 = vadd.f32 %v1569, %v1570
        %v1572 = vld [vmem:[%s12] sm:$0xff]
        %v1573 = vld [vmem:[%s12 + $0x8] sm:$0xff]
        %v1574 = vld [vmem:[%s12 + $0x10] sm:$0xff]
        %v1575 = vld [vmem:[%s12 + $0x18] sm:$0xff]
        %v1576 = vld [vmem:[%s12 + $0x20] sm:$0xff]
        %v1577 = vld [vmem:[%s12 + $0x28] sm:$0xff]
        %v1578 = vld [vmem:[%s12 + $0x30] sm:$0xff]
        %v1579 = vld [vmem:[%s12 + $0x38] sm:$0xff]
        %v1580 = vld [vmem:[#allocation3] sm:$0x1]
        %v1582 = vperm.slane %v1580, 0
        %vm1584 = vcmask 523264
        %v1586 = vsel %vm1584, %v1571, 0
        %1588 = vmatpush.msra.mxu0 0.0
        %1589 = vmatpush.msra.mxu0 0.0
        %1590 = vmatpush.msra.mxu0 0.0
        %1591 = vmatpush.msra.mxu0 0.0
        %1592 = vmatpush.msra.mxu0 0.0
        %1593 = vmatpush.msra.mxu0 0.0
        %1594 = vmatpush.msra.mxu0 0.0
        %1595 = vmatpush.msra.mxu0 0.0
        %1596 = vmatpush.msra.mxu0 %v1579
        %1597 = vmatpush.msra.mxu0 %v1578
        %1598 = vmatpush.msra.mxu0 %v1577
        %1599 = vmatpush.msra.mxu0 %v1576
        %1600 = vmatpush.msra.mxu0 %v1575
        %1601 = vmatpush.msra.mxu0 %v1574
        %1602 = vmatpush.msra.mxu0 %v1573
        %1603 = vmatpush.msra.mxu0 %v1572
        %1604 = vmatmul.f32.gmra.mxu0 %v1586
        %v1605 = vpop.f32.mrf.mxu0
        %v1606 = vadd.f32 %v1582, %v1605
        %1607 = vdwg.mxu0
        %vm1608 = vcmask 1024
        %1609 = vst.msk [vmem:[%s14] sm:$0x3] %vm1608, %v1606
      $region84: #{tpu_custom_call.1} parent=75 // pred_fallthru
        _
      // Predicated region
      $region85: #{tpu_custom_call.1} parent=75 // pred_check
        %p1610 = pneg %p369
      $region86: #{tpu_custom_call.1} parent=75 // pred_check_branch
        %1612 = sbr.rel (%p1610) target = $region88
      $region87: #{tpu_custom_call.1} parent=75 // pred_region
        _
      $region88: #{tpu_custom_call.1} parent=75 // pred_fallthru
        _
      // Predicated region
      $region89: #{tpu_custom_call.1} parent=75 // pred_check
        %p1613 = pneg %p369
      $region90: #{tpu_custom_call.1} parent=75 // pred_check_branch
        %1615 = sbr.rel (%p1613) target = $region92
      $region91: #{tpu_custom_call.1} parent=75 // pred_region
        _
      $region92: #{tpu_custom_call.1} parent=75 // pred_fallthru
        _
    $region76: #{tpu_custom_call.1} parent=5 // pred_fallthru
      _
    %p1616 = scmp.le.s32.totalorder 2, %s22
    // Predicated region
    $region93: #{tpu_custom_call.1} parent=5 // pred_check
      %p1617 = pneg %p1616
    $region94: #{tpu_custom_call.1} parent=5 // pred_check_branch
      %1619 = sbr.rel (%p1617) target = $region96
    $region95: #{tpu_custom_call.1} parent=5 // pred_region
      %s1620 = ssub.s32 %s22, 2
    $region96: #{tpu_custom_call.1} parent=5 // pred_fallthru
      _
  $region6: #{tpu_custom_call.1} parent=0 // loop_footer
    %s26 = sadd.s32 1, %s22
  $region7: #{tpu_custom_call.1} parent=0 // loop_footer_branch
    %21 = sbr.rel target = $region3
  $region8: #{tpu_custom_call.1} parent=0 // loop_exit
    _

</llo_original>
